<compile_context>
chip_gen: v7x
topology: tpu7x:2x2x1
jax: 0.10.0
libtpu: 0.0.40
codegen_flags: <defaults>
</compile_context>

<pallas_src>
import functools
import math

import jax
import jax.numpy as jnp
from jax.experimental import pallas as pl
from jax.experimental.pallas import tpu as pltpu


def _layer_norm(x, gamma, beta, eps=1e-5):
    # LayerNorm stays in f32 (matches PyTorch numerics).
    mu = jnp.mean(x, axis=-1, keepdims=True)
    xc = x - mu
    var = jnp.mean(xc * xc, axis=-1, keepdims=True)
    return xc * jax.lax.rsqrt(var + eps) * gamma + beta


def _transformer_layer_kernel(
    a_ref, alpha_ref,
    q_ref, k_ref, v_ref, dif_ref,
    wk_ref, bk_ref, wv_ref, bv_ref, wo_ref, bo_ref,
    g1_ref, be1_ref, w1_ref, b1_ref, w2_ref, b2_ref, g2_ref, be2_ref,
    out_ref,
    kproj_ref, vproj_ref,
    *, n_heads, d_k, mask_k, zero_pad):
    qi = pl.program_id(1)

    x_q = q_ref[0]                        # (tq, D) f32 -- residual stream
    tq, D = x_q.shape
    S = k_ref.shape[1]
    H = n_heads

    wk = wk_ref[...]                      # (D, D) bf16 -- q & k SHARE k_linear
    wv = wv_ref[...]                      # (D, D) bf16
    bk = bk_ref[...]                      # (1, D) f32
    bv = bv_ref[...]                      # (1, D) f32

    # K/V projections: computed once per batch element and cached in VMEM
    # scratch across all q-row tiles (qi axis is "arbitrary").
    @pl.when(qi == 0)
    def _():
        kp = jnp.dot(k_ref[0], wk, preferred_element_type=jnp.float32) + bk
        vp = jnp.dot(v_ref[0], wv, preferred_element_type=jnp.float32) + bv
        kproj_ref[...] = kp.astype(jnp.bfloat16)
        vproj_ref[...] = vp.astype(jnp.bfloat16)

    # Full-width q projection (single (tq,D)@(D,D) MXU matmul); fold 1/sqrt(dk).
    qp = jnp.dot(x_q.astype(jnp.bfloat16), wk,
                 preferred_element_type=jnp.float32) + bk
    qp = (qp * (1.0 / math.sqrt(d_k))).astype(jnp.bfloat16)       # (tq, D)

    kp = kproj_ref[...]                   # (S, D) bf16
    vp = vproj_ref[...]                   # (S, D) bf16
    dif = dif_ref[0].astype(jnp.float32)  # (tq, S)

    # Global query-row index for causal mask / zero-pad / position effect.
    q0 = qi * tq
    row = q0 + jax.lax.broadcasted_iota(jnp.int32, (tq, S), 0)    # query idx i
    col = jax.lax.broadcasted_iota(jnp.int32, (tq, S), 1)         # key idx j
    allowed = (col - row) < mask_k                                # triu(k=mask)==0
    pos = jnp.abs(row - col).astype(jnp.float32)                  # |i - j|

    a_all = a_ref[...]                    # (H, 1) f32  sigmoid(a)
    al_all = alpha_ref[...]               # (H, 1) f32  softplus(alpha)
    wo = wo_ref[...]                      # (D, D) bf16

    attn_out = None
    for h in range(H):                    # unrolled; per-head lane slices
        lo = h * d_k
        qh = qp[:, lo:lo + d_k]           # (tq, d_k) bf16
        kh = kp[:, lo:lo + d_k]           # (S,  d_k) bf16
        vh = vp[:, lo:lo + d_k]           # (S,  d_k) bf16

        # scores: contraction over d_k, no explicit transpose.
        s = jax.lax.dot_general(qh, kh, (((1,), (1,)), ((), ())),
                                preferred_element_type=jnp.float32)  # (tq, S)

        # Memory decay computed in-kernel: a + (1-a)*exp(-alpha*|i-j|), b = 1.
        a_h = a_all[h:h + 1, :]           # (1, 1) broadcasts over (tq, S)
        al_h = al_all[h:h + 1, :]
        decay = a_h + (1.0 - a_h) * jnp.exp(-al_h * pos)
        s = s * dif * decay
        s = jnp.where(allowed, s, -1e32)

        m = jnp.max(s, axis=-1, keepdims=True)
        e = jnp.exp(s - m)
        denom = jnp.sum(e, axis=-1, keepdims=True)
        p = e * (1.0 / denom)             # exact reciprocal (torch softmax)
        if zero_pad:
            p = jnp.where(row == 0, 0.0, p)   # zero first (global) query row
        # TODO(synk): attention dropout is an inference-mode identity.

        ctx = jnp.dot(p.astype(jnp.bfloat16), vh,
                      preferred_element_type=jnp.float32)          # (tq, d_k)
        # Output projection fused with the head sum (f32 MXU accumulation).
        part = jnp.dot(ctx.astype(jnp.bfloat16), wo[lo:lo + d_k, :],
                       preferred_element_type=jnp.float32)         # (tq, D)
        attn_out = part if attn_out is None else attn_out + part

    attn_out = attn_out + bo_ref[...]

    # residual + LayerNorm1 (f32)
    x1 = _layer_norm(x_q + attn_out, g1_ref[...], be1_ref[...])

    # FFN: linear2(relu(linear1(x)))  (dropouts are identity in eval mode)
    hdn = jnp.dot(x1.astype(jnp.bfloat16), w1_ref[...],
                  preferred_element_type=jnp.float32) + b1_ref[...]
    hdn = jnp.maximum(hdn, 0.0)
    ffn = jnp.dot(hdn.astype(jnp.bfloat16), w2_ref[...],
                  preferred_element_type=jnp.float32) + b2_ref[...]

    # residual + LayerNorm2 (f32)
    out = _layer_norm(x1 + ffn, g2_ref[...], be2_ref[...])
    out_ref[0] = out.astype(out_ref.dtype)


def _vmem_budget_bytes():
    """Per-generation scoped-VMEM request (leave headroom for Mosaic scratch)."""
    try:
        info = pltpu.get_tpu_info()
        cap = getattr(info, "vmem_capacity_bytes", None)
        if cap:
            return int(cap * 0.85)        # ~54 MiB on v7x, ~108 MiB on v5e/v6e
    except Exception:
        pass
    return 48 * 1024 * 1024               # conservative fallback, fits every gen


def transformer_layer(mask, query, key, values, dif_mask, params, *, n_heads):
    """mask: static Python int (0 or 1), same semantics as the PyTorch module."""
    B, S, D = query.shape
    assert D % n_heads == 0
    d_k = D // n_heads
    d_ff = params["w1"].shape[1]
    zero_pad = (mask == 0)

    # ---- host/XLA-side preparation (cheap, done once per call) ----
    a_sig = jax.nn.sigmoid(params["a"]).reshape(n_heads, 1).astype(jnp.float32)
    alpha_sp = jax.nn.softplus(params["alpha"]).reshape(n_heads, 1).astype(jnp.float32)

    wk = params["wk"].astype(jnp.bfloat16)        # (D, D), shared q/k projection
    wv = params["wv"].astype(jnp.bfloat16)
    wo = params["wo"].astype(jnp.bfloat16)
    w1 = params["w1"].astype(jnp.bfloat16)
    w2 = params["w2"].astype(jnp.bfloat16)

    key_bf = key.astype(jnp.bfloat16)             # consumed only by bf16 MXU ops
    values_bf = values.astype(jnp.bfloat16)
    dif_bf = dif_mask.astype(jnp.bfloat16)

    vmem_budget = _vmem_budget_bytes()

    # q-row tiling: bigger tiles on 128 MiB parts (v5e/v6e), smaller on v7x.
    candidates = (1024, 512, 256, 128) if vmem_budget >= 80 * 2**20 else (256, 128)
    tq = S
    for t in candidates:
        if S % t == 0 and S >= t:
            tq = t
            break
    n_q = S // tq

    kernel = functools.partial(
        _transformer_layer_kernel,
        n_heads=n_heads, d_k=d_k, mask_k=int(mask), zero_pad=zero_pad)

    batch_q = lambda b, qi: (b, qi, 0)
    batch_full = lambda b, qi: (b, 0, 0)
    const2 = lambda b, qi: (0, 0)
    single = pl.Buffered(1)   # constant-index weights: no double buffering

    in_specs = [
        pl.BlockSpec((n_heads, 1), const2, pipeline_mode=single),   # sigmoid(a)
        pl.BlockSpec((n_heads, 1), const2, pipeline_mode=single),   # softplus(alpha)
        pl.BlockSpec((1, tq, D), batch_q),           # query (f32, residual path)
        pl.BlockSpec((1, S, D), batch_full),         # key    (bf16)
        pl.BlockSpec((1, S, D), batch_full),         # values (bf16)
        pl.BlockSpec((1, tq, S), batch_q),           # dif_mask (bf16)
        pl.BlockSpec((D, D), const2, pipeline_mode=single),         # wk
        pl.BlockSpec((1, D), const2, pipeline_mode=single),         # bk
        pl.BlockSpec((D, D), const2, pipeline_mode=single),         # wv
        pl.BlockSpec((1, D), const2, pipeline_mode=single),         # bv
        pl.BlockSpec((D, D), const2, pipeline_mode=single),         # wo
        pl.BlockSpec((1, D), const2, pipeline_mode=single),         # bo
        pl.BlockSpec((1, D), const2, pipeline_mode=single),         # ln1 gamma
        pl.BlockSpec((1, D), const2, pipeline_mode=single),         # ln1 beta
        pl.BlockSpec((D, d_ff), const2, pipeline_mode=single),      # w1
        pl.BlockSpec((1, d_ff), const2, pipeline_mode=single),      # b1
        pl.BlockSpec((d_ff, D), const2, pipeline_mode=single),      # w2
        pl.BlockSpec((1, D), const2, pipeline_mode=single),         # b2
        pl.BlockSpec((1, D), const2, pipeline_mode=single),         # ln2 gamma
        pl.BlockSpec((1, D), const2, pipeline_mode=single),         # ln2 beta
    ]

    # Cost estimate (K/V projections done once per batch element now).
    flops = 2 * B * (4 * S * D * D + 2 * S * S * D + 2 * S * D * d_ff)
    transcendentals = 2 * B * n_heads * S * S           # softmax exp + decay exp
    bytes_accessed = (8 * B * S * D                     # q in (f32) + out (f32)
                      + 4 * B * S * D                   # k + v (bf16)
                      + 2 * B * S * S                   # dif_mask (bf16)
                      + 2 * (3 * D * D + 2 * D * d_ff)) # bf16 weights

    return pl.pallas_call(
        kernel,
        grid=(B, n_q),
        in_specs=in_specs,
        out_specs=pl.BlockSpec((1, tq, D), batch_q),
        out_shape=jax.ShapeDtypeStruct((B, S, D), jnp.float32),
        scratch_shapes=[
            pltpu.VMEM((S, D), jnp.bfloat16),   # cached K projection
            pltpu.VMEM((S, D), jnp.bfloat16),   # cached V projection
        ],
        compiler_params=pltpu.CompilerParams(
            # batch stays "parallel" (megacore); qi is "arbitrary" because the
            # cached K/V projections carry state across q-row tiles.
            dimension_semantics=("parallel", "arbitrary"),
            vmem_limit_bytes=vmem_budget),
        cost_estimate=pl.CostEstimate(
            flops=flops, transcendentals=transcendentals,
            bytes_accessed=bytes_accessed),
    )(a_sig, alpha_sp, query, key_bf, values_bf, dif_bf,
      wk, params["bk"], wv, params["bv"], wo, params["bo"],
      params["g1"], params["be1"], w1, params["b1"],
      w2, params["b2"], params["g2"], params["be2"])


def _xavier(key, shape):
    fan_in, fan_out = shape[0], shape[1]
    bound = math.sqrt(6.0 / (fan_in + fan_out))
    return jax.random.uniform(key, shape, jnp.float32, -bound, bound)


def init_params(key, d_model, d_ff, n_heads):
    ks = jax.random.split(key, 8)
    # Linear weights stored as (in, out) so the math is x @ W.
    return {
        "wk": _xavier(ks[0], (d_model, d_model)),
        "bk": jnp.zeros((1, d_model), jnp.float32),
        "wv": _xavier(ks[1], (d_model, d_model)),
        "bv": jnp.zeros((1, d_model), jnp.float32),
        "wo": _xavier(ks[2], (d_model, d_model)),
        "bo": jnp.zeros((1, d_model), jnp.float32),
        "a": _xavier(ks[3], (n_heads, 1)) * 0.5,
        "alpha": _xavier(ks[4], (n_heads, 1)) * 0.5,
        "g1": jnp.ones((1, d_model), jnp.float32),
        "be1": jnp.zeros((1, d_model), jnp.float32),
        "w1": _xavier(ks[5], (d_model, d_ff)),
        "b1": jnp.zeros((1, d_ff), jnp.float32),
        "w2": _xavier(ks[6], (d_ff, d_model)),
        "b2": jnp.zeros((1, d_model), jnp.float32),
        "g2": jnp.ones((1, d_model), jnp.float32),
        "be2": jnp.zeros((1, d_model), jnp.float32),
    }


if __name__ == "__main__":
    B, S, D, H, DFF = 2, 8, 32, 4, 64   # batch, seq, d_model, heads, d_ff
    key = jax.random.PRNGKey(0)
    k_q, k_k, k_v, k_d, k_p = jax.random.split(key, 5)

    query = jax.random.normal(k_q, (B, S, D), jnp.float32)
    keys = jax.random.normal(k_k, (B, S, D), jnp.float32)
    values = jax.random.normal(k_v, (B, S, D), jnp.float32)
    dif_mask = jax.random.uniform(k_d, (B, S, S), jnp.float32, 0.5, 1.5)

    params = init_params(k_p, D, DFF, H)

    # mask == 0 (past-only + zero-padded first row) and mask == 1 (incl. current)
    out0 = transformer_layer(0, query, keys, values, dif_mask, params, n_heads=H)
    out0 = jax.block_until_ready(out0)
    out1 = transformer_layer(1, query, keys, values, dif_mask, params, n_heads=H)
    out1 = jax.block_until_ready(out1)

    assert out0.shape == (B, S, D) and out1.shape == (B, S, D)
    assert bool(jnp.all(jnp.isfinite(out0))) and bool(jnp.all(jnp.isfinite(out1)))
    print("KERNEL_OK")
</pallas_src>

<mosaic_0001>
module attributes {stable_mosaic.version = 11 : i64} {
  func.func @_transformer_layer_kernel(%arg0: i32, %arg1: i32, %arg2: memref<4x1xf32, #tpu.memory_space<vmem>>, %arg3: memref<4x1xf32, #tpu.memory_space<vmem>>, %arg4: memref<1x8x32xf32, #tpu.memory_space<vmem>>, %arg5: memref<1x8x32xbf16, #tpu.memory_space<vmem>>, %arg6: memref<1x8x32xbf16, #tpu.memory_space<vmem>>, %arg7: memref<1x8x8xbf16, #tpu.memory_space<vmem>>, %arg8: memref<32x32xbf16, #tpu.memory_space<vmem>>, %arg9: memref<1x32xf32, #tpu.memory_space<vmem>>, %arg10: memref<32x32xbf16, #tpu.memory_space<vmem>>, %arg11: memref<1x32xf32, #tpu.memory_space<vmem>>, %arg12: memref<32x32xbf16, #tpu.memory_space<vmem>>, %arg13: memref<1x32xf32, #tpu.memory_space<vmem>>, %arg14: memref<1x32xf32, #tpu.memory_space<vmem>>, %arg15: memref<1x32xf32, #tpu.memory_space<vmem>>, %arg16: memref<32x64xbf16, #tpu.memory_space<vmem>>, %arg17: memref<1x64xf32, #tpu.memory_space<vmem>>, %arg18: memref<64x32xbf16, #tpu.memory_space<vmem>>, %arg19: memref<1x32xf32, #tpu.memory_space<vmem>>, %arg20: memref<1x32xf32, #tpu.memory_space<vmem>>, %arg21: memref<1x32xf32, #tpu.memory_space<vmem>>, %arg22: memref<1x8x32xf32, #tpu.memory_space<vmem>>, %arg23: memref<8x32xbf16, #tpu.memory_space<vmem>>, %arg24: memref<8x32xbf16, #tpu.memory_space<vmem>>) attributes {dimension_semantics = [#tpu.dimension_semantics<parallel>, #tpu.dimension_semantics<arbitrary>], iteration_bounds = array<i64: 2, 1>, scalar_prefetch = 0 : i64, scratch_operands = 2 : i64, tpu.core_type = #tpu.core_type<tc>, window_params = [{pipeline_mode = #tpu.pipeline_mode<synchronous>, transform_indices = @transform_0, window_bounds = array<i64: 4, 1>}, {pipeline_mode = #tpu.pipeline_mode<synchronous>, transform_indices = @transform_1, window_bounds = array<i64: 4, 1>}, {transform_indices = @transform_2, window_bounds = array<i64: 1, 8, 32>}, {transform_indices = @transform_3, window_bounds = array<i64: 1, 8, 32>}, {transform_indices = @transform_4, window_bounds = array<i64: 1, 8, 32>}, {transform_indices = @transform_5, window_bounds = array<i64: 1, 8, 8>}, {pipeline_mode = #tpu.pipeline_mode<synchronous>, transform_indices = @transform_6, window_bounds = array<i64: 32, 32>}, {pipeline_mode = #tpu.pipeline_mode<synchronous>, transform_indices = @transform_7, window_bounds = array<i64: 1, 32>}, {pipeline_mode = #tpu.pipeline_mode<synchronous>, transform_indices = @transform_8, window_bounds = array<i64: 32, 32>}, {pipeline_mode = #tpu.pipeline_mode<synchronous>, transform_indices = @transform_9, window_bounds = array<i64: 1, 32>}, {pipeline_mode = #tpu.pipeline_mode<synchronous>, transform_indices = @transform_10, window_bounds = array<i64: 32, 32>}, {pipeline_mode = #tpu.pipeline_mode<synchronous>, transform_indices = @transform_11, window_bounds = array<i64: 1, 32>}, {pipeline_mode = #tpu.pipeline_mode<synchronous>, transform_indices = @transform_12, window_bounds = array<i64: 1, 32>}, {pipeline_mode = #tpu.pipeline_mode<synchronous>, transform_indices = @transform_13, window_bounds = array<i64: 1, 32>}, {pipeline_mode = #tpu.pipeline_mode<synchronous>, transform_indices = @transform_14, window_bounds = array<i64: 32, 64>}, {pipeline_mode = #tpu.pipeline_mode<synchronous>, transform_indices = @transform_15, window_bounds = array<i64: 1, 64>}, {pipeline_mode = #tpu.pipeline_mode<synchronous>, transform_indices = @transform_16, window_bounds = array<i64: 64, 32>}, {pipeline_mode = #tpu.pipeline_mode<synchronous>, transform_indices = @transform_17, window_bounds = array<i64: 1, 32>}, {pipeline_mode = #tpu.pipeline_mode<synchronous>, transform_indices = @transform_18, window_bounds = array<i64: 1, 32>}, {pipeline_mode = #tpu.pipeline_mode<synchronous>, transform_indices = @transform_19, window_bounds = array<i64: 1, 32>}, {transform_indices = @transform_20, window_bounds = array<i64: 1, 8, 32>}]} {
    %c0 = arith.constant 0 : index
    %c0_0 = arith.constant 0 : index
    %c0_1 = arith.constant 0 : index
    %0 = vector.load %arg4[%c0, %c0_0, %c0_1] : memref<1x8x32xf32, #tpu.memory_space<vmem>>, vector<1x8x32xf32>
    %1 = vector.shape_cast %0 : vector<1x8x32xf32> to vector<8x32xf32>
    %c0_2 = arith.constant 0 : index
    %c0_3 = arith.constant 0 : index
    %2 = vector.load %arg8[%c0_2, %c0_3] : memref<32x32xbf16, #tpu.memory_space<vmem>>, vector<32x32xbf16>
    %c0_4 = arith.constant 0 : index
    %c0_5 = arith.constant 0 : index
    %3 = vector.load %arg10[%c0_4, %c0_5] : memref<32x32xbf16, #tpu.memory_space<vmem>>, vector<32x32xbf16>
    %c0_6 = arith.constant 0 : index
    %c0_7 = arith.constant 0 : index
    %4 = vector.load %arg9[%c0_6, %c0_7] : memref<1x32xf32, #tpu.memory_space<vmem>>, vector<1x32xf32>
    %c0_8 = arith.constant 0 : index
    %c0_9 = arith.constant 0 : index
    %5 = vector.load %arg11[%c0_8, %c0_9] : memref<1x32xf32, #tpu.memory_space<vmem>>, vector<1x32xf32>
    %c0_i32 = arith.constant 0 : i32
    %6 = arith.cmpi eq, %arg1, %c0_i32 : i32
    %7 = arith.extui %6 : i1 to i32
    %c0_i32_10 = arith.constant 0 : i32
    %8 = arith.cmpi ne, %7, %c0_i32_10 : i32
    scf.if %8 {
      %c0_104 = arith.constant 0 : index
      %c0_105 = arith.constant 0 : index
      %c0_106 = arith.constant 0 : index
      %268 = vector.load %arg5[%c0_104, %c0_105, %c0_106] : memref<1x8x32xbf16, #tpu.memory_space<vmem>>, vector<1x8x32xbf16>
      %269 = vector.shape_cast %268 : vector<1x8x32xbf16> to vector<8x32xbf16>
      %cst_107 = arith.constant dense<0.000000e+00> : vector<8x32xf32>
      %270 = tpu.matmul %269, %2, %cst_107 {dimension_numbers = #tpu.dot_dimension_numbers<[1], [0], [0], [1], [0, 0, 1, 1], [], []>} : vector<8x32xbf16>, vector<32x32xbf16>, vector<8x32xf32> -> vector<8x32xf32>
      %271 = vector.broadcast %4 : vector<1x32xf32> to vector<8x32xf32>
      %272 = arith.addf %270, %271 : vector<8x32xf32>
      %c0_108 = arith.constant 0 : index
      %c0_109 = arith.constant 0 : index
      %c0_110 = arith.constant 0 : index
      %273 = vector.load %arg6[%c0_108, %c0_109, %c0_110] : memref<1x8x32xbf16, #tpu.memory_space<vmem>>, vector<1x8x32xbf16>
      %274 = vector.shape_cast %273 : vector<1x8x32xbf16> to vector<8x32xbf16>
      %cst_111 = arith.constant dense<0.000000e+00> : vector<8x32xf32>
      %275 = tpu.matmul %274, %3, %cst_111 {dimension_numbers = #tpu.dot_dimension_numbers<[1], [0], [0], [1], [0, 0, 1, 1], [], []>} : vector<8x32xbf16>, vector<32x32xbf16>, vector<8x32xf32> -> vector<8x32xf32>
      %276 = vector.broadcast %5 : vector<1x32xf32> to vector<8x32xf32>
      %277 = arith.addf %275, %276 : vector<8x32xf32>
      %278 = arith.truncf %272 : vector<8x32xf32> to vector<8x32xbf16>
      %c0_112 = arith.constant 0 : index
      %c0_113 = arith.constant 0 : index
      %279 = vector.load %arg23[%c0_112, %c0_113] : memref<8x32xbf16, #tpu.memory_space<vmem>>, vector<8x32xbf16>
      tpu.vector_store %arg23[%c0_112, %c0_113], %278 {strides = array<i32>} : memref<8x32xbf16, #tpu.memory_space<vmem>>, vector<8x32xbf16>,
      %280 = arith.truncf %277 : vector<8x32xf32> to vector<8x32xbf16>
      %c0_114 = arith.constant 0 : index
      %c0_115 = arith.constant 0 : index
      %281 = vector.load %arg24[%c0_114, %c0_115] : memref<8x32xbf16, #tpu.memory_space<vmem>>, vector<8x32xbf16>
      tpu.vector_store %arg24[%c0_114, %c0_115], %280 {strides = array<i32>} : memref<8x32xbf16, #tpu.memory_space<vmem>>, vector<8x32xbf16>,
    } else {
    }
    %9 = arith.truncf %1 : vector<8x32xf32> to vector<8x32xbf16>
    %cst = arith.constant dense<0.000000e+00> : vector<8x32xf32>
    %10 = tpu.matmul %9, %2, %cst {dimension_numbers = #tpu.dot_dimension_numbers<[1], [0], [0], [1], [0, 0, 1, 1], [], []>} : vector<8x32xbf16>, vector<32x32xbf16>, vector<8x32xf32> -> vector<8x32xf32>
    %11 = vector.broadcast %4 : vector<1x32xf32> to vector<8x32xf32>
    %12 = arith.addf %10, %11 : vector<8x32xf32>
    %cst_11 = arith.constant 0.353553385 : f32
    %13 = vector.broadcast %cst_11 : f32 to vector<8x32xf32>
    %14 = arith.mulf %12, %13 : vector<8x32xf32>
    %15 = arith.truncf %14 : vector<8x32xf32> to vector<8x32xbf16>
    %c0_12 = arith.constant 0 : index
    %c0_13 = arith.constant 0 : index
    %16 = vector.load %arg23[%c0_12, %c0_13] : memref<8x32xbf16, #tpu.memory_space<vmem>>, vector<8x32xbf16>
    %c0_14 = arith.constant 0 : index
    %c0_15 = arith.constant 0 : index
    %17 = vector.load %arg24[%c0_14, %c0_15] : memref<8x32xbf16, #tpu.memory_space<vmem>>, vector<8x32xbf16>
    %c0_16 = arith.constant 0 : index
    %c0_17 = arith.constant 0 : index
    %c0_18 = arith.constant 0 : index
    %18 = vector.load %arg7[%c0_16, %c0_17, %c0_18] : memref<1x8x8xbf16, #tpu.memory_space<vmem>>, vector<1x8x8xbf16>
    %19 = vector.shape_cast %18 : vector<1x8x8xbf16> to vector<8x8xbf16>
    %20 = arith.extf %19 : vector<8x8xbf16> to vector<8x8xf32>
    %c8_i32 = arith.constant 8 : i32
    %21 = arith.muli %arg1, %c8_i32 : i32
    %22 = tpu.iota {dimensions = array<i32: 0>} : vector<8x8xi32>
    %23 = vector.broadcast %21 : i32 to vector<8x8xi32>
    %24 = arith.addi %23, %22 : vector<8x8xi32>
    %25 = tpu.iota {dimensions = array<i32: 1>} : vector<8x8xi32>
    %26 = arith.subi %25, %24 : vector<8x8xi32>
    %c0_i32_19 = arith.constant 0 : i32
    %27 = vector.broadcast %c0_i32_19 : i32 to vector<8x8xi32>
    %28 = arith.cmpi slt, %26, %27 : vector<8x8xi32>
    %29 = arith.subi %24, %25 : vector<8x8xi32>
    %30 = math.absi %29 : vector<8x8xi32>
    %31 = arith.sitofp %30 : vector<8x8xi32> to vector<8x8xf32>
    %c0_20 = arith.constant 0 : index
    %c0_21 = arith.constant 0 : index
    %32 = vector.load %arg2[%c0_20, %c0_21] : memref<4x1xf32, #tpu.memory_space<vmem>>, vector<4x1xf32>
    %c0_22 = arith.constant 0 : index
    %c0_23 = arith.constant 0 : index
    %33 = vector.load %arg3[%c0_22, %c0_23] : memref<4x1xf32, #tpu.memory_space<vmem>>, vector<4x1xf32>
    %c0_24 = arith.constant 0 : index
    %c0_25 = arith.constant 0 : index
    %34 = vector.load %arg12[%c0_24, %c0_25] : memref<32x32xbf16, #tpu.memory_space<vmem>>, vector<32x32xbf16>
    %35 = vector.extract_strided_slice %15 {offsets = [0, 0], sizes = [8, 8], strides = [1, 1]} : vector<8x32xbf16> to vector<8x8xbf16>
    %36 = vector.extract_strided_slice %16 {offsets = [0, 0], sizes = [8, 8], strides = [1, 1]} : vector<8x32xbf16> to vector<8x8xbf16>
    %37 = vector.extract_strided_slice %17 {offsets = [0, 0], sizes = [8, 8], strides = [1, 1]} : vector<8x32xbf16> to vector<8x8xbf16>
    %cst_26 = arith.constant dense<0.000000e+00> : vector<8x8xf32>
    %38 = tpu.matmul %35, %36, %cst_26 {dimension_numbers = #tpu.dot_dimension_numbers<[1], [1], [0], [0], [0, 0, 1, 0], [], []>} : vector<8x8xbf16>, vector<8x8xbf16>, vector<8x8xf32> -> vector<8x8xf32>
    %39 = vector.extract_strided_slice %32 {offsets = [0, 0], sizes = [1, 1], strides = [1, 1]} : vector<4x1xf32> to vector<1x1xf32>
    %40 = vector.extract_strided_slice %33 {offsets = [0, 0], sizes = [1, 1], strides = [1, 1]} : vector<4x1xf32> to vector<1x1xf32>
    %cst_27 = arith.constant 1.000000e+00 : f32
    %41 = vector.broadcast %cst_27 : f32 to vector<1x1xf32>
    %42 = arith.subf %41, %39 : vector<1x1xf32>
    %cst_28 = arith.constant 0.000000e+00 : f32
    %43 = vector.broadcast %cst_28 : f32 to vector<1x1xf32>
    %44 = arith.subf %43, %40 : vector<1x1xf32>
    %45 = vector.broadcast %44 : vector<1x1xf32> to vector<8x8xf32>
    %46 = arith.mulf %45, %31 : vector<8x8xf32>
    %47 = math.exp %46 : vector<8x8xf32>
    %48 = vector.broadcast %42 : vector<1x1xf32> to vector<8x8xf32>
    %49 = arith.mulf %48, %47 : vector<8x8xf32>
    %50 = vector.broadcast %39 : vector<1x1xf32> to vector<8x8xf32>
    %51 = arith.addf %50, %49 : vector<8x8xf32>
    %52 = arith.mulf %38, %20 : vector<8x8xf32>
    %53 = arith.mulf %52, %51 : vector<8x8xf32>
    %cst_29 = arith.constant -1.000000e+32 : f32
    %54 = vector.broadcast %cst_29 : f32 to vector<8x8xf32>
    %55 = arith.select %28, %53, %54 : vector<8x8xi1>, vector<8x8xf32>
    %cst_30 = arith.constant dense<0xFF800000> : vector<8xf32>
    %56 = vector.multi_reduction <maximumf>, %55, %cst_30 [1] : vector<8x8xf32> to vector<8xf32>
    %57 = vector.shape_cast %56 : vector<8xf32> to vector<8x1xf32>
    %58 = vector.broadcast %57 : vector<8x1xf32> to vector<8x8xf32>
    %59 = arith.subf %55, %58 : vector<8x8xf32>
    %60 = math.exp %59 : vector<8x8xf32>
    %cst_31 = arith.constant dense<0.000000e+00> : vector<8xf32>
    %61 = vector.multi_reduction <add>, %60, %cst_31 [1] : vector<8x8xf32> to vector<8xf32>
    %62 = vector.shape_cast %61 : vector<8xf32> to vector<8x1xf32>
    %cst_32 = arith.constant 1.000000e+00 : f32
    %63 = vector.broadcast %cst_32 : f32 to vector<8x1xf32>
    %64 = arith.divf %63, %62 : vector<8x1xf32>
    %65 = vector.broadcast %64 : vector<8x1xf32> to vector<8x8xf32>
    %66 = arith.mulf %60, %65 : vector<8x8xf32>
    %c0_i32_33 = arith.constant 0 : i32
    %67 = vector.broadcast %c0_i32_33 : i32 to vector<8x8xi32>
    %68 = arith.cmpi eq, %24, %67 : vector<8x8xi32>
    %cst_34 = arith.constant 0.000000e+00 : f32
    %69 = vector.broadcast %cst_34 : f32 to vector<8x8xf32>
    %70 = arith.select %68, %69, %66 : vector<8x8xi1>, vector<8x8xf32>
    %71 = arith.truncf %70 : vector<8x8xf32> to vector<8x8xbf16>
    %cst_35 = arith.constant dense<0.000000e+00> : vector<8x8xf32>
    %72 = tpu.matmul %71, %37, %cst_35 {dimension_numbers = #tpu.dot_dimension_numbers<[1], [0], [0], [1], [0, 0, 1, 1], [], []>} : vector<8x8xbf16>, vector<8x8xbf16>, vector<8x8xf32> -> vector<8x8xf32>
    %73 = arith.truncf %72 : vector<8x8xf32> to vector<8x8xbf16>
    %74 = vector.extract_strided_slice %34 {offsets = [0, 0], sizes = [8, 32], strides = [1, 1]} : vector<32x32xbf16> to vector<8x32xbf16>
    %cst_36 = arith.constant dense<0.000000e+00> : vector<8x32xf32>
    %75 = tpu.matmul %73, %74, %cst_36 {dimension_numbers = #tpu.dot_dimension_numbers<[1], [0], [0], [1], [0, 0, 1, 1], [], []>} : vector<8x8xbf16>, vector<8x32xbf16>, vector<8x32xf32> -> vector<8x32xf32>
    %76 = vector.extract_strided_slice %15 {offsets = [0, 8], sizes = [8, 8], strides = [1, 1]} : vector<8x32xbf16> to vector<8x8xbf16>
    %77 = vector.extract_strided_slice %16 {offsets = [0, 8], sizes = [8, 8], strides = [1, 1]} : vector<8x32xbf16> to vector<8x8xbf16>
    %78 = vector.extract_strided_slice %17 {offsets = [0, 8], sizes = [8, 8], strides = [1, 1]} : vector<8x32xbf16> to vector<8x8xbf16>
    %cst_37 = arith.constant dense<0.000000e+00> : vector<8x8xf32>
    %79 = tpu.matmul %76, %77, %cst_37 {dimension_numbers = #tpu.dot_dimension_numbers<[1], [1], [0], [0], [0, 0, 1, 0], [], []>} : vector<8x8xbf16>, vector<8x8xbf16>, vector<8x8xf32> -> vector<8x8xf32>
    %80 = vector.extract_strided_slice %32 {offsets = [1, 0], sizes = [1, 1], strides = [1, 1]} : vector<4x1xf32> to vector<1x1xf32>
    %81 = vector.extract_strided_slice %33 {offsets = [1, 0], sizes = [1, 1], strides = [1, 1]} : vector<4x1xf32> to vector<1x1xf32>
    %cst_38 = arith.constant 1.000000e+00 : f32
    %82 = vector.broadcast %cst_38 : f32 to vector<1x1xf32>
    %83 = arith.subf %82, %80 : vector<1x1xf32>
    %cst_39 = arith.constant 0.000000e+00 : f32
    %84 = vector.broadcast %cst_39 : f32 to vector<1x1xf32>
    %85 = arith.subf %84, %81 : vector<1x1xf32>
    %86 = vector.broadcast %85 : vector<1x1xf32> to vector<8x8xf32>
    %87 = arith.mulf %86, %31 : vector<8x8xf32>
    %88 = math.exp %87 : vector<8x8xf32>
    %89 = vector.broadcast %83 : vector<1x1xf32> to vector<8x8xf32>
    %90 = arith.mulf %89, %88 : vector<8x8xf32>
    %91 = vector.broadcast %80 : vector<1x1xf32> to vector<8x8xf32>
    %92 = arith.addf %91, %90 : vector<8x8xf32>
    %93 = arith.mulf %79, %20 : vector<8x8xf32>
    %94 = arith.mulf %93, %92 : vector<8x8xf32>
    %cst_40 = arith.constant -1.000000e+32 : f32
    %95 = vector.broadcast %cst_40 : f32 to vector<8x8xf32>
    %96 = arith.select %28, %94, %95 : vector<8x8xi1>, vector<8x8xf32>
    %cst_41 = arith.constant dense<0xFF800000> : vector<8xf32>
    %97 = vector.multi_reduction <maximumf>, %96, %cst_41 [1] : vector<8x8xf32> to vector<8xf32>
    %98 = vector.shape_cast %97 : vector<8xf32> to vector<8x1xf32>
    %99 = vector.broadcast %98 : vector<8x1xf32> to vector<8x8xf32>
    %100 = arith.subf %96, %99 : vector<8x8xf32>
    %101 = math.exp %100 : vector<8x8xf32>
    %cst_42 = arith.constant dense<0.000000e+00> : vector<8xf32>
    %102 = vector.multi_reduction <add>, %101, %cst_42 [1] : vector<8x8xf32> to vector<8xf32>
    %103 = vector.shape_cast %102 : vector<8xf32> to vector<8x1xf32>
    %cst_43 = arith.constant 1.000000e+00 : f32
    %104 = vector.broadcast %cst_43 : f32 to vector<8x1xf32>
    %105 = arith.divf %104, %103 : vector<8x1xf32>
    %106 = vector.broadcast %105 : vector<8x1xf32> to vector<8x8xf32>
    %107 = arith.mulf %101, %106 : vector<8x8xf32>
    %c0_i32_44 = arith.constant 0 : i32
    %108 = vector.broadcast %c0_i32_44 : i32 to vector<8x8xi32>
    %109 = arith.cmpi eq, %24, %108 : vector<8x8xi32>
    %cst_45 = arith.constant 0.000000e+00 : f32
    %110 = vector.broadcast %cst_45 : f32 to vector<8x8xf32>
    %111 = arith.select %109, %110, %107 : vector<8x8xi1>, vector<8x8xf32>
    %112 = arith.truncf %111 : vector<8x8xf32> to vector<8x8xbf16>
    %cst_46 = arith.constant dense<0.000000e+00> : vector<8x8xf32>
    %113 = tpu.matmul %112, %78, %cst_46 {dimension_numbers = #tpu.dot_dimension_numbers<[1], [0], [0], [1], [0, 0, 1, 1], [], []>} : vector<8x8xbf16>, vector<8x8xbf16>, vector<8x8xf32> -> vector<8x8xf32>
    %114 = arith.truncf %113 : vector<8x8xf32> to vector<8x8xbf16>
    %115 = vector.extract_strided_slice %34 {offsets = [8, 0], sizes = [8, 32], strides = [1, 1]} : vector<32x32xbf16> to vector<8x32xbf16>
    %cst_47 = arith.constant dense<0.000000e+00> : vector<8x32xf32>
    %116 = tpu.matmul %114, %115, %cst_47 {dimension_numbers = #tpu.dot_dimension_numbers<[1], [0], [0], [1], [0, 0, 1, 1], [], []>} : vector<8x8xbf16>, vector<8x32xbf16>, vector<8x32xf32> -> vector<8x32xf32>
    %117 = arith.addf %75, %116 : vector<8x32xf32>
    %118 = vector.extract_strided_slice %15 {offsets = [0, 16], sizes = [8, 8], strides = [1, 1]} : vector<8x32xbf16> to vector<8x8xbf16>
    %119 = vector.extract_strided_slice %16 {offsets = [0, 16], sizes = [8, 8], strides = [1, 1]} : vector<8x32xbf16> to vector<8x8xbf16>
    %120 = vector.extract_strided_slice %17 {offsets = [0, 16], sizes = [8, 8], strides = [1, 1]} : vector<8x32xbf16> to vector<8x8xbf16>
    %cst_48 = arith.constant dense<0.000000e+00> : vector<8x8xf32>
    %121 = tpu.matmul %118, %119, %cst_48 {dimension_numbers = #tpu.dot_dimension_numbers<[1], [1], [0], [0], [0, 0, 1, 0], [], []>} : vector<8x8xbf16>, vector<8x8xbf16>, vector<8x8xf32> -> vector<8x8xf32>
    %122 = vector.extract_strided_slice %32 {offsets = [2, 0], sizes = [1, 1], strides = [1, 1]} : vector<4x1xf32> to vector<1x1xf32>
    %123 = vector.extract_strided_slice %33 {offsets = [2, 0], sizes = [1, 1], strides = [1, 1]} : vector<4x1xf32> to vector<1x1xf32>
    %cst_49 = arith.constant 1.000000e+00 : f32
    %124 = vector.broadcast %cst_49 : f32 to vector<1x1xf32>
    %125 = arith.subf %124, %122 : vector<1x1xf32>
    %cst_50 = arith.constant 0.000000e+00 : f32
    %126 = vector.broadcast %cst_50 : f32 to vector<1x1xf32>
    %127 = arith.subf %126, %123 : vector<1x1xf32>
    %128 = vector.broadcast %127 : vector<1x1xf32> to vector<8x8xf32>
    %129 = arith.mulf %128, %31 : vector<8x8xf32>
    %130 = math.exp %129 : vector<8x8xf32>
    %131 = vector.broadcast %125 : vector<1x1xf32> to vector<8x8xf32>
    %132 = arith.mulf %131, %130 : vector<8x8xf32>
    %133 = vector.broadcast %122 : vector<1x1xf32> to vector<8x8xf32>
    %134 = arith.addf %133, %132 : vector<8x8xf32>
    %135 = arith.mulf %121, %20 : vector<8x8xf32>
    %136 = arith.mulf %135, %134 : vector<8x8xf32>
    %cst_51 = arith.constant -1.000000e+32 : f32
    %137 = vector.broadcast %cst_51 : f32 to vector<8x8xf32>
    %138 = arith.select %28, %136, %137 : vector<8x8xi1>, vector<8x8xf32>
    %cst_52 = arith.constant dense<0xFF800000> : vector<8xf32>
    %139 = vector.multi_reduction <maximumf>, %138, %cst_52 [1] : vector<8x8xf32> to vector<8xf32>
    %140 = vector.shape_cast %139 : vector<8xf32> to vector<8x1xf32>
    %141 = vector.broadcast %140 : vector<8x1xf32> to vector<8x8xf32>
    %142 = arith.subf %138, %141 : vector<8x8xf32>
    %143 = math.exp %142 : vector<8x8xf32>
    %cst_53 = arith.constant dense<0.000000e+00> : vector<8xf32>
    %144 = vector.multi_reduction <add>, %143, %cst_53 [1] : vector<8x8xf32> to vector<8xf32>
    %145 = vector.shape_cast %144 : vector<8xf32> to vector<8x1xf32>
    %cst_54 = arith.constant 1.000000e+00 : f32
    %146 = vector.broadcast %cst_54 : f32 to vector<8x1xf32>
    %147 = arith.divf %146, %145 : vector<8x1xf32>
    %148 = vector.broadcast %147 : vector<8x1xf32> to vector<8x8xf32>
    %149 = arith.mulf %143, %148 : vector<8x8xf32>
    %c0_i32_55 = arith.constant 0 : i32
    %150 = vector.broadcast %c0_i32_55 : i32 to vector<8x8xi32>
    %151 = arith.cmpi eq, %24, %150 : vector<8x8xi32>
    %cst_56 = arith.constant 0.000000e+00 : f32
    %152 = vector.broadcast %cst_56 : f32 to vector<8x8xf32>
    %153 = arith.select %151, %152, %149 : vector<8x8xi1>, vector<8x8xf32>
    %154 = arith.truncf %153 : vector<8x8xf32> to vector<8x8xbf16>
    %cst_57 = arith.constant dense<0.000000e+00> : vector<8x8xf32>
    %155 = tpu.matmul %154, %120, %cst_57 {dimension_numbers = #tpu.dot_dimension_numbers<[1], [0], [0], [1], [0, 0, 1, 1], [], []>} : vector<8x8xbf16>, vector<8x8xbf16>, vector<8x8xf32> -> vector<8x8xf32>
    %156 = arith.truncf %155 : vector<8x8xf32> to vector<8x8xbf16>
    %157 = vector.extract_strided_slice %34 {offsets = [16, 0], sizes = [8, 32], strides = [1, 1]} : vector<32x32xbf16> to vector<8x32xbf16>
    %cst_58 = arith.constant dense<0.000000e+00> : vector<8x32xf32>
    %158 = tpu.matmul %156, %157, %cst_58 {dimension_numbers = #tpu.dot_dimension_numbers<[1], [0], [0], [1], [0, 0, 1, 1], [], []>} : vector<8x8xbf16>, vector<8x32xbf16>, vector<8x32xf32> -> vector<8x32xf32>
    %159 = arith.addf %117, %158 : vector<8x32xf32>
    %160 = vector.extract_strided_slice %15 {offsets = [0, 24], sizes = [8, 8], strides = [1, 1]} : vector<8x32xbf16> to vector<8x8xbf16>
    %161 = vector.extract_strided_slice %16 {offsets = [0, 24], sizes = [8, 8], strides = [1, 1]} : vector<8x32xbf16> to vector<8x8xbf16>
    %162 = vector.extract_strided_slice %17 {offsets = [0, 24], sizes = [8, 8], strides = [1, 1]} : vector<8x32xbf16> to vector<8x8xbf16>
    %cst_59 = arith.constant dense<0.000000e+00> : vector<8x8xf32>
    %163 = tpu.matmul %160, %161, %cst_59 {dimension_numbers = #tpu.dot_dimension_numbers<[1], [1], [0], [0], [0, 0, 1, 0], [], []>} : vector<8x8xbf16>, vector<8x8xbf16>, vector<8x8xf32> -> vector<8x8xf32>
    %164 = vector.extract_strided_slice %32 {offsets = [3, 0], sizes = [1, 1], strides = [1, 1]} : vector<4x1xf32> to vector<1x1xf32>
    %165 = vector.extract_strided_slice %33 {offsets = [3, 0], sizes = [1, 1], strides = [1, 1]} : vector<4x1xf32> to vector<1x1xf32>
    %cst_60 = arith.constant 1.000000e+00 : f32
    %166 = vector.broadcast %cst_60 : f32 to vector<1x1xf32>
    %167 = arith.subf %166, %164 : vector<1x1xf32>
    %cst_61 = arith.constant 0.000000e+00 : f32
    %168 = vector.broadcast %cst_61 : f32 to vector<1x1xf32>
    %169 = arith.subf %168, %165 : vector<1x1xf32>
    %170 = vector.broadcast %169 : vector<1x1xf32> to vector<8x8xf32>
    %171 = arith.mulf %170, %31 : vector<8x8xf32>
    %172 = math.exp %171 : vector<8x8xf32>
    %173 = vector.broadcast %167 : vector<1x1xf32> to vector<8x8xf32>
    %174 = arith.mulf %173, %172 : vector<8x8xf32>
    %175 = vector.broadcast %164 : vector<1x1xf32> to vector<8x8xf32>
    %176 = arith.addf %175, %174 : vector<8x8xf32>
    %177 = arith.mulf %163, %20 : vector<8x8xf32>
    %178 = arith.mulf %177, %176 : vector<8x8xf32>
    %cst_62 = arith.constant -1.000000e+32 : f32
    %179 = vector.broadcast %cst_62 : f32 to vector<8x8xf32>
    %180 = arith.select %28, %178, %179 : vector<8x8xi1>, vector<8x8xf32>
    %cst_63 = arith.constant dense<0xFF800000> : vector<8xf32>
    %181 = vector.multi_reduction <maximumf>, %180, %cst_63 [1] : vector<8x8xf32> to vector<8xf32>
    %182 = vector.shape_cast %181 : vector<8xf32> to vector<8x1xf32>
    %183 = vector.broadcast %182 : vector<8x1xf32> to vector<8x8xf32>
    %184 = arith.subf %180, %183 : vector<8x8xf32>
    %185 = math.exp %184 : vector<8x8xf32>
    %cst_64 = arith.constant dense<0.000000e+00> : vector<8xf32>
    %186 = vector.multi_reduction <add>, %185, %cst_64 [1] : vector<8x8xf32> to vector<8xf32>
    %187 = vector.shape_cast %186 : vector<8xf32> to vector<8x1xf32>
    %cst_65 = arith.constant 1.000000e+00 : f32
    %188 = vector.broadcast %cst_65 : f32 to vector<8x1xf32>
    %189 = arith.divf %188, %187 : vector<8x1xf32>
    %190 = vector.broadcast %189 : vector<8x1xf32> to vector<8x8xf32>
    %191 = arith.mulf %185, %190 : vector<8x8xf32>
    %c0_i32_66 = arith.constant 0 : i32
    %192 = vector.broadcast %c0_i32_66 : i32 to vector<8x8xi32>
    %193 = arith.cmpi eq, %24, %192 : vector<8x8xi32>
    %cst_67 = arith.constant 0.000000e+00 : f32
    %194 = vector.broadcast %cst_67 : f32 to vector<8x8xf32>
    %195 = arith.select %193, %194, %191 : vector<8x8xi1>, vector<8x8xf32>
    %196 = arith.truncf %195 : vector<8x8xf32> to vector<8x8xbf16>
    %cst_68 = arith.constant dense<0.000000e+00> : vector<8x8xf32>
    %197 = tpu.matmul %196, %162, %cst_68 {dimension_numbers = #tpu.dot_dimension_numbers<[1], [0], [0], [1], [0, 0, 1, 1], [], []>} : vector<8x8xbf16>, vector<8x8xbf16>, vector<8x8xf32> -> vector<8x8xf32>
    %198 = arith.truncf %197 : vector<8x8xf32> to vector<8x8xbf16>
    %199 = vector.extract_strided_slice %34 {offsets = [24, 0], sizes = [8, 32], strides = [1, 1]} : vector<32x32xbf16> to vector<8x32xbf16>
    %cst_69 = arith.constant dense<0.000000e+00> : vector<8x32xf32>
    %200 = tpu.matmul %198, %199, %cst_69 {dimension_numbers = #tpu.dot_dimension_numbers<[1], [0], [0], [1], [0, 0, 1, 1], [], []>} : vector<8x8xbf16>, vector<8x32xbf16>, vector<8x32xf32> -> vector<8x32xf32>
    %201 = arith.addf %159, %200 : vector<8x32xf32>
    %c0_70 = arith.constant 0 : index
    %c0_71 = arith.constant 0 : index
    %202 = vector.load %arg13[%c0_70, %c0_71] : memref<1x32xf32, #tpu.memory_space<vmem>>, vector<1x32xf32>
    %203 = vector.broadcast %202 : vector<1x32xf32> to vector<8x32xf32>
    %204 = arith.addf %201, %203 : vector<8x32xf32>
    %205 = arith.addf %1, %204 : vector<8x32xf32>
    %c0_72 = arith.constant 0 : index
    %c0_73 = arith.constant 0 : index
    %206 = vector.load %arg14[%c0_72, %c0_73] : memref<1x32xf32, #tpu.memory_space<vmem>>, vector<1x32xf32>
    %c0_74 = arith.constant 0 : index
    %c0_75 = arith.constant 0 : index
    %207 = vector.load %arg15[%c0_74, %c0_75] : memref<1x32xf32, #tpu.memory_space<vmem>>, vector<1x32xf32>
    %cst_76 = arith.constant dense<0.000000e+00> : vector<8xf32>
    %208 = vector.multi_reduction <add>, %205, %cst_76 [1] : vector<8x32xf32> to vector<8xf32>
    %209 = vector.shape_cast %208 : vector<8xf32> to vector<8x1xf32>
    %cst_77 = arith.constant 3.200000e+01 : f32
    %210 = vector.broadcast %cst_77 : f32 to vector<8x1xf32>
    %211 = arith.divf %209, %210 : vector<8x1xf32>
    %212 = vector.broadcast %211 : vector<8x1xf32> to vector<8x32xf32>
    %213 = arith.subf %205, %212 : vector<8x32xf32>
    %214 = arith.mulf %213, %213 : vector<8x32xf32>
    %cst_78 = arith.constant dense<0.000000e+00> : vector<8xf32>
    %215 = vector.multi_reduction <add>, %214, %cst_78 [1] : vector<8x32xf32> to vector<8xf32>
    %216 = vector.shape_cast %215 : vector<8xf32> to vector<8x1xf32>
    %cst_79 = arith.constant 3.200000e+01 : f32
    %217 = vector.broadcast %cst_79 : f32 to vector<8x1xf32>
    %218 = arith.divf %216, %217 : vector<8x1xf32>
    %cst_80 = arith.constant 9.99999974E-6 : f32
    %219 = vector.broadcast %cst_80 : f32 to vector<8x1xf32>
    %220 = arith.addf %218, %219 : vector<8x1xf32>
    %221 = math.rsqrt %220 : vector<8x1xf32>
    %222 = vector.broadcast %221 : vector<8x1xf32> to vector<8x32xf32>
    %223 = arith.mulf %213, %222 : vector<8x32xf32>
    %224 = vector.broadcast %206 : vector<1x32xf32> to vector<8x32xf32>
    %225 = arith.mulf %223, %224 : vector<8x32xf32>
    %226 = vector.broadcast %207 : vector<1x32xf32> to vector<8x32xf32>
    %227 = arith.addf %225, %226 : vector<8x32xf32>
    %228 = arith.truncf %227 : vector<8x32xf32> to vector<8x32xbf16>
    %c0_81 = arith.constant 0 : index
    %c0_82 = arith.constant 0 : index
    %229 = vector.load %arg16[%c0_81, %c0_82] : memref<32x64xbf16, #tpu.memory_space<vmem>>, vector<32x64xbf16>
    %cst_83 = arith.constant dense<0.000000e+00> : vector<8x64xf32>
    %230 = tpu.matmul %228, %229, %cst_83 {dimension_numbers = #tpu.dot_dimension_numbers<[1], [0], [0], [1], [0, 0, 1, 1], [], []>} : vector<8x32xbf16>, vector<32x64xbf16>, vector<8x64xf32> -> vector<8x64xf32>
    %c0_84 = arith.constant 0 : index
    %c0_85 = arith.constant 0 : index
    %231 = vector.load %arg17[%c0_84, %c0_85] : memref<1x64xf32, #tpu.memory_space<vmem>>, vector<1x64xf32>
    %232 = vector.broadcast %231 : vector<1x64xf32> to vector<8x64xf32>
    %233 = arith.addf %230, %232 : vector<8x64xf32>
    %cst_86 = arith.constant 0.000000e+00 : f32
    %234 = vector.broadcast %cst_86 : f32 to vector<8x64xf32>
    %235 = arith.maximumf %233, %234 : vector<8x64xf32>
    %236 = arith.truncf %235 : vector<8x64xf32> to vector<8x64xbf16>
    %c0_87 = arith.constant 0 : index
    %c0_88 = arith.constant 0 : index
    %237 = vector.load %arg18[%c0_87, %c0_88] : memref<64x32xbf16, #tpu.memory_space<vmem>>, vector<64x32xbf16>
    %cst_89 = arith.constant dense<0.000000e+00> : vector<8x32xf32>
    %238 = tpu.matmul %236, %237, %cst_89 {dimension_numbers = #tpu.dot_dimension_numbers<[1], [0], [0], [1], [0, 0, 1, 1], [], []>} : vector<8x64xbf16>, vector<64x32xbf16>, vector<8x32xf32> -> vector<8x32xf32>
    %c0_90 = arith.constant 0 : index
    %c0_91 = arith.constant 0 : index
    %239 = vector.load %arg19[%c0_90, %c0_91] : memref<1x32xf32, #tpu.memory_space<vmem>>, vector<1x32xf32>
    %240 = vector.broadcast %239 : vector<1x32xf32> to vector<8x32xf32>
    %241 = arith.addf %238, %240 : vector<8x32xf32>
    %242 = arith.addf %227, %241 : vector<8x32xf32>
    %c0_92 = arith.constant 0 : index
    %c0_93 = arith.constant 0 : index
    %243 = vector.load %arg20[%c0_92, %c0_93] : memref<1x32xf32, #tpu.memory_space<vmem>>, vector<1x32xf32>
    %c0_94 = arith.constant 0 : index
    %c0_95 = arith.constant 0 : index
    %244 = vector.load %arg21[%c0_94, %c0_95] : memref<1x32xf32, #tpu.memory_space<vmem>>, vector<1x32xf32>
    %cst_96 = arith.constant dense<0.000000e+00> : vector<8xf32>
    %245 = vector.multi_reduction <add>, %242, %cst_96 [1] : vector<8x32xf32> to vector<8xf32>
    %246 = vector.shape_cast %245 : vector<8xf32> to vector<8x1xf32>
    %cst_97 = arith.constant 3.200000e+01 : f32
    %247 = vector.broadcast %cst_97 : f32 to vector<8x1xf32>
    %248 = arith.divf %246, %247 : vector<8x1xf32>
    %249 = vector.broadcast %248 : vector<8x1xf32> to vector<8x32xf32>
    %250 = arith.subf %242, %249 : vector<8x32xf32>
    %251 = arith.mulf %250, %250 : vector<8x32xf32>
    %cst_98 = arith.constant dense<0.000000e+00> : vector<8xf32>
    %252 = vector.multi_reduction <add>, %251, %cst_98 [1] : vector<8x32xf32> to vector<8xf32>
    %253 = vector.shape_cast %252 : vector<8xf32> to vector<8x1xf32>
    %cst_99 = arith.constant 3.200000e+01 : f32
    %254 = vector.broadcast %cst_99 : f32 to vector<8x1xf32>
    %255 = arith.divf %253, %254 : vector<8x1xf32>
    %cst_100 = arith.constant 9.99999974E-6 : f32
    %256 = vector.broadcast %cst_100 : f32 to vector<8x1xf32>
    %257 = arith.addf %255, %256 : vector<8x1xf32>
    %258 = math.rsqrt %257 : vector<8x1xf32>
    %259 = vector.broadcast %258 : vector<8x1xf32> to vector<8x32xf32>
    %260 = arith.mulf %250, %259 : vector<8x32xf32>
    %261 = vector.broadcast %243 : vector<1x32xf32> to vector<8x32xf32>
    %262 = arith.mulf %260, %261 : vector<8x32xf32>
    %263 = vector.broadcast %244 : vector<1x32xf32> to vector<8x32xf32>
    %264 = arith.addf %262, %263 : vector<8x32xf32>
    %c0_101 = arith.constant 0 : index
    %c0_102 = arith.constant 0 : index
    %c0_103 = arith.constant 0 : index
    %265 = vector.load %arg22[%c0_101, %c0_102, %c0_103] : memref<1x8x32xf32, #tpu.memory_space<vmem>>, vector<1x8x32xf32>
    %266 = vector.shape_cast %265 : vector<1x8x32xf32> to vector<8x32xf32>
    %267 = vector.shape_cast %264 : vector<8x32xf32> to vector<1x8x32xf32>
    tpu.vector_store %arg22[%c0_101, %c0_102, %c0_103], %267 {strides = array<i32>} : memref<1x8x32xf32, #tpu.memory_space<vmem>>, vector<1x8x32xf32>,
    return
  }
  func.func @transform_0(%arg0: i32, %arg1: i32) -> (i32, i32) {
    %c0_i32 = arith.constant 0 : i32
    %c0_i32_0 = arith.constant 0 : i32
    %c0_i32_1 = arith.constant 0 : i32
    return %c0_i32, %c0_i32_0 : i32, i32
  }
  func.func @transform_1(%arg0: i32, %arg1: i32) -> (i32, i32) {
    %c0_i32 = arith.constant 0 : i32
    %c0_i32_0 = arith.constant 0 : i32
    %c0_i32_1 = arith.constant 0 : i32
    return %c0_i32, %c0_i32_0 : i32, i32
  }
  func.func @transform_2(%arg0: i32, %arg1: i32) -> (i32, i32, i32) {
    %c0_i32 = arith.constant 0 : i32
    %c0_i32_0 = arith.constant 0 : i32
    return %arg0, %arg1, %c0_i32 : i32, i32, i32
  }
  func.func @transform_3(%arg0: i32, %arg1: i32) -> (i32, i32, i32) {
    %c0_i32 = arith.constant 0 : i32
    %c0_i32_0 = arith.constant 0 : i32
    %c0_i32_1 = arith.constant 0 : i32
    return %arg0, %c0_i32, %c0_i32_0 : i32, i32, i32
  }
  func.func @transform_4(%arg0: i32, %arg1: i32) -> (i32, i32, i32) {
    %c0_i32 = arith.constant 0 : i32
    %c0_i32_0 = arith.constant 0 : i32
    %c0_i32_1 = arith.constant 0 : i32
    return %arg0, %c0_i32, %c0_i32_0 : i32, i32, i32
  }
  func.func @transform_5(%arg0: i32, %arg1: i32) -> (i32, i32, i32) {
    %c0_i32 = arith.constant 0 : i32
    %c0_i32_0 = arith.constant 0 : i32
    return %arg0, %arg1, %c0_i32 : i32, i32, i32
  }
  func.func @transform_6(%arg0: i32, %arg1: i32) -> (i32, i32) {
    %c0_i32 = arith.constant 0 : i32
    %c0_i32_0 = arith.constant 0 : i32
    %c0_i32_1 = arith.constant 0 : i32
    return %c0_i32, %c0_i32_0 : i32, i32
  }
  func.func @transform_7(%arg0: i32, %arg1: i32) -> (i32, i32) {
    %c0_i32 = arith.constant 0 : i32
    %c0_i32_0 = arith.constant 0 : i32
    %c0_i32_1 = arith.constant 0 : i32
    return %c0_i32, %c0_i32_0 : i32, i32
  }
  func.func @transform_8(%arg0: i32, %arg1: i32) -> (i32, i32) {
    %c0_i32 = arith.constant 0 : i32
    %c0_i32_0 = arith.constant 0 : i32
    %c0_i32_1 = arith.constant 0 : i32
    return %c0_i32, %c0_i32_0 : i32, i32
  }
  func.func @transform_9(%arg0: i32, %arg1: i32) -> (i32, i32) {
    %c0_i32 = arith.constant 0 : i32
    %c0_i32_0 = arith.constant 0 : i32
    %c0_i32_1 = arith.constant 0 : i32
    return %c0_i32, %c0_i32_0 : i32, i32
  }
  func.func @transform_10(%arg0: i32, %arg1: i32) -> (i32, i32) {
    %c0_i32 = arith.constant 0 : i32
    %c0_i32_0 = arith.constant 0 : i32
    %c0_i32_1 = arith.constant 0 : i32
    return %c0_i32, %c0_i32_0 : i32, i32
  }
  func.func @transform_11(%arg0: i32, %arg1: i32) -> (i32, i32) {
    %c0_i32 = arith.constant 0 : i32
    %c0_i32_0 = arith.constant 0 : i32
    %c0_i32_1 = arith.constant 0 : i32
    return %c0_i32, %c0_i32_0 : i32, i32
  }
  func.func @transform_12(%arg0: i32, %arg1: i32) -> (i32, i32) {
    %c0_i32 = arith.constant 0 : i32
    %c0_i32_0 = arith.constant 0 : i32
    %c0_i32_1 = arith.constant 0 : i32
    return %c0_i32, %c0_i32_0 : i32, i32
  }
  func.func @transform_13(%arg0: i32, %arg1: i32) -> (i32, i32) {
    %c0_i32 = arith.constant 0 : i32
    %c0_i32_0 = arith.constant 0 : i32
    %c0_i32_1 = arith.constant 0 : i32
    return %c0_i32, %c0_i32_0 : i32, i32
  }
  func.func @transform_14(%arg0: i32, %arg1: i32) -> (i32, i32) {
    %c0_i32 = arith.constant 0 : i32
    %c0_i32_0 = arith.constant 0 : i32
    %c0_i32_1 = arith.constant 0 : i32
    return %c0_i32, %c0_i32_0 : i32, i32
  }
  func.func @transform_15(%arg0: i32, %arg1: i32) -> (i32, i32) {
    %c0_i32 = arith.constant 0 : i32
    %c0_i32_0 = arith.constant 0 : i32
    %c0_i32_1 = arith.constant 0 : i32
    return %c0_i32, %c0_i32_0 : i32, i32
  }
  func.func @transform_16(%arg0: i32, %arg1: i32) -> (i32, i32) {
    %c0_i32 = arith.constant 0 : i32
    %c0_i32_0 = arith.constant 0 : i32
    %c0_i32_1 = arith.constant 0 : i32
    return %c0_i32, %c0_i32_0 : i32, i32
  }
  func.func @transform_17(%arg0: i32, %arg1: i32) -> (i32, i32) {
    %c0_i32 = arith.constant 0 : i32
    %c0_i32_0 = arith.constant 0 : i32
    %c0_i32_1 = arith.constant 0 : i32
    return %c0_i32, %c0_i32_0 : i32, i32
  }
  func.func @transform_18(%arg0: i32, %arg1: i32) -> (i32, i32) {
    %c0_i32 = arith.constant 0 : i32
    %c0_i32_0 = arith.constant 0 : i32
    %c0_i32_1 = arith.constant 0 : i32
    return %c0_i32, %c0_i32_0 : i32, i32
  }
  func.func @transform_19(%arg0: i32, %arg1: i32) -> (i32, i32) {
    %c0_i32 = arith.constant 0 : i32
    %c0_i32_0 = arith.constant 0 : i32
    %c0_i32_1 = arith.constant 0 : i32
    return %c0_i32, %c0_i32_0 : i32, i32
  }
  func.func @transform_20(%arg0: i32, %arg1: i32) -> (i32, i32, i32) {
    %c0_i32 = arith.constant 0 : i32
    %c0_i32_0 = arith.constant 0 : i32
    return %arg0, %arg1, %c0_i32 : i32, i32, i32
  }
}

</mosaic_0001>

<llo_original>
// kernel: tpu_custom_call.1
$region0: #{tpu_custom_call.1}
  #allocation0 [shape = 'u32[]', space=smem, size = 0x4, offset = 0x4, fixed_abs, tag = 'smem constant byte address 0x4 - core index']
  #allocation1 [shape = 'u32[144,128]{1,0:T(1,128)}', space=vmem, size = 0x12000, scoped, tag = 'internal scratch']
  #allocation2 [shape = 'bf16[8,32]{1,0:T(8,128)(2,1)}', space=vmem, size = 0x800, scoped, tag = 'scratch operand']
  #allocation3 [shape = 'bf16[8,32]{1,0:T(8,128)(2,1)}', space=vmem, size = 0x800, scoped, tag = 'scratch operand']
  %s0 = inlined_call_operand.vmem [shape: f32[4,1], index: 0, kind: input, shape index: {}]
  %s1 = inlined_call_operand.vmem [shape: f32[4,1], index: 1, kind: input, shape index: {}]
  %s2 = inlined_call_operand.vmem [shape: f32[2,8,32], index: 2, kind: input, shape index: {}]
  %s3 = inlined_call_operand.hbm [shape: bf16[2,8,32], index: 3, kind: input, shape index: {}]
  %s4 = inlined_call_operand.hbm [shape: bf16[2,8,32], index: 4, kind: input, shape index: {}]
  %s5 = inlined_call_operand.hbm [shape: bf16[2,8,8], index: 5, kind: input, shape index: {}]
  %s6 = inlined_call_operand.vmem [shape: bf16[32,32], index: 6, kind: input, shape index: {}]
  %s7 = inlined_call_operand.vmem [shape: f32[1,32], index: 7, kind: input, shape index: {}]
  %s8 = inlined_call_operand.vmem [shape: bf16[32,32], index: 8, kind: input, shape index: {}]
  %s9 = inlined_call_operand.vmem [shape: f32[1,32], index: 9, kind: input, shape index: {}]
  %s10 = inlined_call_operand.vmem [shape: bf16[32,32], index: 10, kind: input, shape index: {}]
  %s11 = inlined_call_operand.vmem [shape: f32[1,32], index: 11, kind: input, shape index: {}]
  %s12 = inlined_call_operand.vmem [shape: f32[1,32], index: 12, kind: input, shape index: {}]
  %s13 = inlined_call_operand.vmem [shape: f32[1,32], index: 13, kind: input, shape index: {}]
  %s14 = inlined_call_operand.vmem [shape: bf16[32,64], index: 14, kind: input, shape index: {}]
  %s15 = inlined_call_operand.vmem [shape: f32[1,64], index: 15, kind: input, shape index: {}]
  %s16 = inlined_call_operand.vmem [shape: bf16[64,32], index: 16, kind: input, shape index: {}]
  %s17 = inlined_call_operand.vmem [shape: f32[1,32], index: 17, kind: input, shape index: {}]
  %s18 = inlined_call_operand.vmem [shape: f32[1,32], index: 18, kind: input, shape index: {}]
  %s19 = inlined_call_operand.vmem [shape: f32[1,32], index: 19, kind: input, shape index: {}]
  %s20 = inlined_call_operand.hbm [shape: f32[2,8,32], index: 20, kind: output, shape index: {}]
  %s21 = sld [smem:[#allocation0]]
  $region129: #{tpu_custom_call.1} parent=0
    _
  %s23 = ssub.s32 1, %s21
  %s24 = scalar_select 0, %s23, %s21
  $region1: #{tpu_custom_call.1} parent=0
    #allocation4 [shape = 'u8[4096]{0}', space=vmem, size = 0x1000, scoped, tag = 'input window, operand 3']
    #allocation5 [shape = 's32[2]{0}', space=sflag, size = 0x8, scoped, tag = 'scoped memory for tpu_custom_call.1']
    #allocation6 [shape = 's32[2]{0}', space=sflag, size = 0x8, scoped, tag = 'scoped memory for tpu_custom_call.1']
    #allocation7 [shape = 'u8[4096]{0}', space=vmem, size = 0x1000, scoped, tag = 'input window, operand 4']
    #allocation8 [shape = 's32[2]{0}', space=sflag, size = 0x8, scoped, tag = 'scoped memory for tpu_custom_call.1']
    #allocation9 [shape = 'u8[4096]{0}', space=vmem, size = 0x1000, scoped, tag = 'input window, operand 5']
    #allocation10 [shape = 'u8[8192]{0}', space=vmem, size = 0x2000, scoped, tag = 'output window, operand 0']
    %25 = vsyncpa [#allocation5], 0
    %s26 = scalar_lea.sflag [#allocation5], 1
    %27 = vsyncpa %s26, 0
    %28 = vsyncpa [#allocation8], 0
    %s29 = scalar_lea.sflag [#allocation8], 1
    %30 = vsyncpa %s29, 0
    %31 = vsyncpa [#allocation6], 0
    %s32 = scalar_lea.sflag [#allocation6], 1
    %33 = vsyncpa %s32, 0
    loop: start=0, step=1, limit=4
    $region2: #{tpu_custom_call.1} parent=1 // loop_pre_header
      _
    $region3: #{tpu_custom_call.1} parent=1 // loop_header
      %s35 = sphi 0, %s39
      %p36 = scmp.ge.s32.totalorder %s35, 4
      %s42 = sphi 0, %s54
      %s43 = sphi 0, %s50
      %s44 = sphi 0, %s42
      %s45 = sphi 0, %s43
      %s46 = sphi 0, %s44
      %s47 = sphi 0, %s45
      %s55 = sphi 0, %s55
      %s57 = sphi 0, %s55
      %s58 = sphi 0, %s57
      %s72 = sphi 0, %s58
      %s76 = sphi 0, %s76
      %s78 = sphi 0, %s76
      %s79 = sphi 0, %s78
      %s93 = sphi 0, %s79
      %s101 = sphi 0, %s103
      %s104 = sphi 0, %s101
      %s105 = sphi 0, %s104
      %s121 = sphi 0, %s105
      %s127 = sphi 0, %s129
      %s130 = sphi 0, %s127
      %s131 = sphi 0, %s130
      %s147 = sphi 0, %s131
      %s153 = sphi 0, %s155
      %s156 = sphi 0, %s153
      %s157 = sphi 0, %s156
      %s173 = sphi 0, %s157
      %s181 = sphi 0, %s183
      %s184 = sphi 0, %s181
      %s185 = sphi 0, %s184
      %s201 = sphi 0, %s185
      %s205 = sphi 0, %s205
      %s207 = sphi 0, %s205
      %s208 = sphi 0, %s207
      %s222 = sphi 0, %s208
      %s226 = sphi 0, %s226
      %s228 = sphi 0, %s226
      %s229 = sphi 0, %s228
      %s243 = sphi 0, %s229
      %s247 = sphi 0, %s247
      %s249 = sphi 0, %s247
      %s250 = sphi 0, %s249
      %s264 = sphi 0, %s250
      %s268 = sphi 0, %s268
      %s270 = sphi 0, %s268
      %s271 = sphi 0, %s270
      %s285 = sphi 0, %s271
      %s289 = sphi 0, %s289
      %s291 = sphi 0, %s289
      %s292 = sphi 0, %s291
      %s306 = sphi 0, %s292
      %s310 = sphi 0, %s310
      %s312 = sphi 0, %s310
      %s313 = sphi 0, %s312
      %s327 = sphi 0, %s313
      %s331 = sphi 0, %s331
      %s333 = sphi 0, %s331
      %s334 = sphi 0, %s333
      %s348 = sphi 0, %s334
      %s352 = sphi 0, %s352
      %s354 = sphi 0, %s352
      %s355 = sphi 0, %s354
      %s369 = sphi 0, %s355
      %s373 = sphi 0, %s373
      %s375 = sphi 0, %s373
      %s376 = sphi 0, %s375
      %s390 = sphi 0, %s376
      %s394 = sphi 0, %s394
      %s396 = sphi 0, %s394
      %s397 = sphi 0, %s396
      %s411 = sphi 0, %s397
      %s415 = sphi 0, %s415
      %s417 = sphi 0, %s415
      %s418 = sphi 0, %s417
      %s432 = sphi 0, %s418
      %s436 = sphi 0, %s436
      %s438 = sphi 0, %s436
      %s439 = sphi 0, %s438
      %s453 = sphi 0, %s439
      %s457 = sphi 0, %s457
      %s459 = sphi 0, %s457
      %s460 = sphi 0, %s459
      %s474 = sphi 0, %s460
      %s478 = sphi 0, %s478
      %s480 = sphi 0, %s478
      %s481 = sphi 0, %s480
      %s495 = sphi 0, %s481
      %s503 = sphi 0, %s505
      %s506 = sphi 0, %s503
      %s507 = sphi 0, %s506
      %s523 = sphi 0, %s507
    $region4: #{tpu_custom_call.1} parent=1 // loop_header_branch
      %38 = sbr.rel (%p36) target = $region8
    $region5: #{tpu_custom_call.1} parent=1 // loop_body
      %s40 = ssub.s32 %s35, 1
      %s41 = ssub.s32 %s35, 2
      %s48 = sadd.s32 1, %s43
      %p49 = scmp.ge.s32.totalorder %s48, 1
      %s50 = scalar_select %p49, 0, %s48
      %s51 = sadd.s32 1, %s42
      %s52 = scalar_select %p49, %s51, %s42
      %p53 = scmp.ge.s32.totalorder %s52, 2
      %s54 = scalar_select %p53, 0, %s52
      %s56 = sadd.s32 %s55, 1
      %p59 = scmp.eq.s32.totalorder %s35, 1
      %p60 = scmp.ne.s32.totalorder %s55, %s57
      %p61 = scmp.eq.s32.totalorder %s35, 0
      %p62 = por %p60, %p61
      %p63 = scmp.ne.s32.totalorder %s55, %s57
      %p64 = scmp.eq.s32.totalorder %s40, 1
      %p65 = por %p63, %p64
      %p66 = scmp.ne.s32.totalorder %s57, %s58
      %p67 = scmp.eq.s32.totalorder %s40, 0
      %p68 = por %p66, %p67
      %p69 = scmp.ne.s32.totalorder %s57, %s58
      %p70 = scmp.eq.s32.totalorder %s41, 1
      %p71 = por %p69, %p70
      %p73 = scmp.ne.s32.totalorder %s58, %s72
      %p74 = scmp.eq.s32.totalorder %s41, 0
      %p75 = por %p73, %p74
      %s77 = sadd.s32 %s76, 1
      %p80 = scmp.eq.s32.totalorder %s35, 1
      %p81 = scmp.ne.s32.totalorder %s76, %s78
      %p82 = scmp.eq.s32.totalorder %s35, 0
      %p83 = por %p81, %p82
      %p84 = scmp.ne.s32.totalorder %s76, %s78
      %p85 = scmp.eq.s32.totalorder %s40, 1
      %p86 = por %p84, %p85
      %p87 = scmp.ne.s32.totalorder %s78, %s79
      %p88 = scmp.eq.s32.totalorder %s40, 0
      %p89 = por %p87, %p88
      %p90 = scmp.ne.s32.totalorder %s78, %s79
      %p91 = scmp.eq.s32.totalorder %s41, 1
      %p92 = por %p90, %p91
      %p94 = scmp.ne.s32.totalorder %s79, %s93
      %p95 = scmp.eq.s32.totalorder %s41, 0
      %p96 = por %p94, %p95
      %s97 = ssub.s32 %s42, %s54
      %s98 = ssub.s32 %s43, %s50
      %s99 = sor.u32 %s97, %s98
      %p100 = scmp.eq.s32.totalorder %s99, 0
      %s102 = sadd.s32 %s101, 1
      %s103 = scalar_select %p100, %s101, %s102
      %p106 = pneg %p100
      %p107 = scmp.eq.s32.totalorder %s35, 1
      %p108 = por %p106, %p107
      %p109 = scmp.ne.s32.totalorder %s101, %s104
      %p110 = scmp.eq.s32.totalorder %s35, 0
      %p111 = por %p109, %p110
      %p112 = scmp.ne.s32.totalorder %s101, %s104
      %p113 = scmp.eq.s32.totalorder %s40, 1
      %p114 = por %p112, %p113
      %p115 = scmp.ne.s32.totalorder %s104, %s105
      %p116 = scmp.eq.s32.totalorder %s40, 0
      %p117 = por %p115, %p116
      %p118 = scmp.ne.s32.totalorder %s104, %s105
      %p119 = scmp.eq.s32.totalorder %s41, 1
      %p120 = por %p118, %p119
      %p122 = scmp.ne.s32.totalorder %s105, %s121
      %p123 = scmp.eq.s32.totalorder %s41, 0
      %p124 = por %p122, %p123
      %s125 = ssub.s32 %s42, %s54
      %p126 = scmp.eq.s32.totalorder %s125, 0
      %s128 = sadd.s32 %s127, 1
      %s129 = scalar_select %p126, %s127, %s128
      %p132 = pneg %p126
      %p133 = scmp.eq.s32.totalorder %s35, 1
      %p134 = por %p132, %p133
      %p135 = scmp.ne.s32.totalorder %s127, %s130
      %p136 = scmp.eq.s32.totalorder %s35, 0
      %p137 = por %p135, %p136
      %p138 = scmp.ne.s32.totalorder %s127, %s130
      %p139 = scmp.eq.s32.totalorder %s40, 1
      %p140 = por %p138, %p139
      %p141 = scmp.ne.s32.totalorder %s130, %s131
      %p142 = scmp.eq.s32.totalorder %s40, 0
      %p143 = por %p141, %p142
      %p144 = scmp.ne.s32.totalorder %s130, %s131
      %p145 = scmp.eq.s32.totalorder %s41, 1
      %p146 = por %p144, %p145
      %p148 = scmp.ne.s32.totalorder %s131, %s147
      %p149 = scmp.eq.s32.totalorder %s41, 0
      %p150 = por %p148, %p149
      %s151 = ssub.s32 %s42, %s54
      %p152 = scmp.eq.s32.totalorder %s151, 0
      %s154 = sadd.s32 %s153, 1
      %s155 = scalar_select %p152, %s153, %s154
      %p158 = pneg %p152
      %p159 = scmp.eq.s32.totalorder %s35, 1
      %p160 = por %p158, %p159
      %p161 = scmp.ne.s32.totalorder %s153, %s156
      %p162 = scmp.eq.s32.totalorder %s35, 0
      %p163 = por %p161, %p162
      %p164 = scmp.ne.s32.totalorder %s153, %s156
      %p165 = scmp.eq.s32.totalorder %s40, 1
      %p166 = por %p164, %p165
      %p167 = scmp.ne.s32.totalorder %s156, %s157
      %p168 = scmp.eq.s32.totalorder %s40, 0
      %p169 = por %p167, %p168
      %p170 = scmp.ne.s32.totalorder %s156, %s157
      %p171 = scmp.eq.s32.totalorder %s41, 1
      %p172 = por %p170, %p171
      %p174 = scmp.ne.s32.totalorder %s157, %s173
      %p175 = scmp.eq.s32.totalorder %s41, 0
      %p176 = por %p174, %p175
      %s177 = ssub.s32 %s42, %s54
      %s178 = ssub.s32 %s43, %s50
      %s179 = sor.u32 %s177, %s178
      %p180 = scmp.eq.s32.totalorder %s179, 0
      %s182 = sadd.s32 %s181, 1
      %s183 = scalar_select %p180, %s181, %s182
      %p186 = pneg %p180
      %p187 = scmp.eq.s32.totalorder %s35, 1
      %p188 = por %p186, %p187
      %p189 = scmp.ne.s32.totalorder %s181, %s184
      %p190 = scmp.eq.s32.totalorder %s35, 0
      %p191 = por %p189, %p190
      %p192 = scmp.ne.s32.totalorder %s181, %s184
      %p193 = scmp.eq.s32.totalorder %s40, 1
      %p194 = por %p192, %p193
      %p195 = scmp.ne.s32.totalorder %s184, %s185
      %p196 = scmp.eq.s32.totalorder %s40, 0
      %p197 = por %p195, %p196
      %p198 = scmp.ne.s32.totalorder %s184, %s185
      %p199 = scmp.eq.s32.totalorder %s41, 1
      %p200 = por %p198, %p199
      %p202 = scmp.ne.s32.totalorder %s185, %s201
      %p203 = scmp.eq.s32.totalorder %s41, 0
      %p204 = por %p202, %p203
      %s206 = sadd.s32 %s205, 1
      %p209 = scmp.eq.s32.totalorder %s35, 1
      %p210 = scmp.ne.s32.totalorder %s205, %s207
      %p211 = scmp.eq.s32.totalorder %s35, 0
      %p212 = por %p210, %p211
      %p213 = scmp.ne.s32.totalorder %s205, %s207
      %p214 = scmp.eq.s32.totalorder %s40, 1
      %p215 = por %p213, %p214
      %p216 = scmp.ne.s32.totalorder %s207, %s208
      %p217 = scmp.eq.s32.totalorder %s40, 0
      %p218 = por %p216, %p217
      %p219 = scmp.ne.s32.totalorder %s207, %s208
      %p220 = scmp.eq.s32.totalorder %s41, 1
      %p221 = por %p219, %p220
      %p223 = scmp.ne.s32.totalorder %s208, %s222
      %p224 = scmp.eq.s32.totalorder %s41, 0
      %p225 = por %p223, %p224
      %s227 = sadd.s32 %s226, 1
      %p230 = scmp.eq.s32.totalorder %s35, 1
      %p231 = scmp.ne.s32.totalorder %s226, %s228
      %p232 = scmp.eq.s32.totalorder %s35, 0
      %p233 = por %p231, %p232
      %p234 = scmp.ne.s32.totalorder %s226, %s228
      %p235 = scmp.eq.s32.totalorder %s40, 1
      %p236 = por %p234, %p235
      %p237 = scmp.ne.s32.totalorder %s228, %s229
      %p238 = scmp.eq.s32.totalorder %s40, 0
      %p239 = por %p237, %p238
      %p240 = scmp.ne.s32.totalorder %s228, %s229
      %p241 = scmp.eq.s32.totalorder %s41, 1
      %p242 = por %p240, %p241
      %p244 = scmp.ne.s32.totalorder %s229, %s243
      %p245 = scmp.eq.s32.totalorder %s41, 0
      %p246 = por %p244, %p245
      %s248 = sadd.s32 %s247, 1
      %p251 = scmp.eq.s32.totalorder %s35, 1
      %p252 = scmp.ne.s32.totalorder %s247, %s249
      %p253 = scmp.eq.s32.totalorder %s35, 0
      %p254 = por %p252, %p253
      %p255 = scmp.ne.s32.totalorder %s247, %s249
      %p256 = scmp.eq.s32.totalorder %s40, 1
      %p257 = por %p255, %p256
      %p258 = scmp.ne.s32.totalorder %s249, %s250
      %p259 = scmp.eq.s32.totalorder %s40, 0
      %p260 = por %p258, %p259
      %p261 = scmp.ne.s32.totalorder %s249, %s250
      %p262 = scmp.eq.s32.totalorder %s41, 1
      %p263 = por %p261, %p262
      %p265 = scmp.ne.s32.totalorder %s250, %s264
      %p266 = scmp.eq.s32.totalorder %s41, 0
      %p267 = por %p265, %p266
      %s269 = sadd.s32 %s268, 1
      %p272 = scmp.eq.s32.totalorder %s35, 1
      %p273 = scmp.ne.s32.totalorder %s268, %s270
      %p274 = scmp.eq.s32.totalorder %s35, 0
      %p275 = por %p273, %p274
      %p276 = scmp.ne.s32.totalorder %s268, %s270
      %p277 = scmp.eq.s32.totalorder %s40, 1
      %p278 = por %p276, %p277
      %p279 = scmp.ne.s32.totalorder %s270, %s271
      %p280 = scmp.eq.s32.totalorder %s40, 0
      %p281 = por %p279, %p280
      %p282 = scmp.ne.s32.totalorder %s270, %s271
      %p283 = scmp.eq.s32.totalorder %s41, 1
      %p284 = por %p282, %p283
      %p286 = scmp.ne.s32.totalorder %s271, %s285
      %p287 = scmp.eq.s32.totalorder %s41, 0
      %p288 = por %p286, %p287
      %s290 = sadd.s32 %s289, 1
      %p293 = scmp.eq.s32.totalorder %s35, 1
      %p294 = scmp.ne.s32.totalorder %s289, %s291
      %p295 = scmp.eq.s32.totalorder %s35, 0
      %p296 = por %p294, %p295
      %p297 = scmp.ne.s32.totalorder %s289, %s291
      %p298 = scmp.eq.s32.totalorder %s40, 1
      %p299 = por %p297, %p298
      %p300 = scmp.ne.s32.totalorder %s291, %s292
      %p301 = scmp.eq.s32.totalorder %s40, 0
      %p302 = por %p300, %p301
      %p303 = scmp.ne.s32.totalorder %s291, %s292
      %p304 = scmp.eq.s32.totalorder %s41, 1
      %p305 = por %p303, %p304
      %p307 = scmp.ne.s32.totalorder %s292, %s306
      %p308 = scmp.eq.s32.totalorder %s41, 0
      %p309 = por %p307, %p308
      %s311 = sadd.s32 %s310, 1
      %p314 = scmp.eq.s32.totalorder %s35, 1
      %p315 = scmp.ne.s32.totalorder %s310, %s312
      %p316 = scmp.eq.s32.totalorder %s35, 0
      %p317 = por %p315, %p316
      %p318 = scmp.ne.s32.totalorder %s310, %s312
      %p319 = scmp.eq.s32.totalorder %s40, 1
      %p320 = por %p318, %p319
      %p321 = scmp.ne.s32.totalorder %s312, %s313
      %p322 = scmp.eq.s32.totalorder %s40, 0
      %p323 = por %p321, %p322
      %p324 = scmp.ne.s32.totalorder %s312, %s313
      %p325 = scmp.eq.s32.totalorder %s41, 1
      %p326 = por %p324, %p325
      %p328 = scmp.ne.s32.totalorder %s313, %s327
      %p329 = scmp.eq.s32.totalorder %s41, 0
      %p330 = por %p328, %p329
      %s332 = sadd.s32 %s331, 1
      %p335 = scmp.eq.s32.totalorder %s35, 1
      %p336 = scmp.ne.s32.totalorder %s331, %s333
      %p337 = scmp.eq.s32.totalorder %s35, 0
      %p338 = por %p336, %p337
      %p339 = scmp.ne.s32.totalorder %s331, %s333
      %p340 = scmp.eq.s32.totalorder %s40, 1
      %p341 = por %p339, %p340
      %p342 = scmp.ne.s32.totalorder %s333, %s334
      %p343 = scmp.eq.s32.totalorder %s40, 0
      %p344 = por %p342, %p343
      %p345 = scmp.ne.s32.totalorder %s333, %s334
      %p346 = scmp.eq.s32.totalorder %s41, 1
      %p347 = por %p345, %p346
      %p349 = scmp.ne.s32.totalorder %s334, %s348
      %p350 = scmp.eq.s32.totalorder %s41, 0
      %p351 = por %p349, %p350
      %s353 = sadd.s32 %s352, 1
      %p356 = scmp.eq.s32.totalorder %s35, 1
      %p357 = scmp.ne.s32.totalorder %s352, %s354
      %p358 = scmp.eq.s32.totalorder %s35, 0
      %p359 = por %p357, %p358
      %p360 = scmp.ne.s32.totalorder %s352, %s354
      %p361 = scmp.eq.s32.totalorder %s40, 1
      %p362 = por %p360, %p361
      %p363 = scmp.ne.s32.totalorder %s354, %s355
      %p364 = scmp.eq.s32.totalorder %s40, 0
      %p365 = por %p363, %p364
      %p366 = scmp.ne.s32.totalorder %s354, %s355
      %p367 = scmp.eq.s32.totalorder %s41, 1
      %p368 = por %p366, %p367
      %p370 = scmp.ne.s32.totalorder %s355, %s369
      %p371 = scmp.eq.s32.totalorder %s41, 0
      %p372 = por %p370, %p371
      %s374 = sadd.s32 %s373, 1
      %p377 = scmp.eq.s32.totalorder %s35, 1
      %p378 = scmp.ne.s32.totalorder %s373, %s375
      %p379 = scmp.eq.s32.totalorder %s35, 0
      %p380 = por %p378, %p379
      %p381 = scmp.ne.s32.totalorder %s373, %s375
      %p382 = scmp.eq.s32.totalorder %s40, 1
      %p383 = por %p381, %p382
      %p384 = scmp.ne.s32.totalorder %s375, %s376
      %p385 = scmp.eq.s32.totalorder %s40, 0
      %p386 = por %p384, %p385
      %p387 = scmp.ne.s32.totalorder %s375, %s376
      %p388 = scmp.eq.s32.totalorder %s41, 1
      %p389 = por %p387, %p388
      %p391 = scmp.ne.s32.totalorder %s376, %s390
      %p392 = scmp.eq.s32.totalorder %s41, 0
      %p393 = por %p391, %p392
      %s395 = sadd.s32 %s394, 1
      %p398 = scmp.eq.s32.totalorder %s35, 1
      %p399 = scmp.ne.s32.totalorder %s394, %s396
      %p400 = scmp.eq.s32.totalorder %s35, 0
      %p401 = por %p399, %p400
      %p402 = scmp.ne.s32.totalorder %s394, %s396
      %p403 = scmp.eq.s32.totalorder %s40, 1
      %p404 = por %p402, %p403
      %p405 = scmp.ne.s32.totalorder %s396, %s397
      %p406 = scmp.eq.s32.totalorder %s40, 0
      %p407 = por %p405, %p406
      %p408 = scmp.ne.s32.totalorder %s396, %s397
      %p409 = scmp.eq.s32.totalorder %s41, 1
      %p410 = por %p408, %p409
      %p412 = scmp.ne.s32.totalorder %s397, %s411
      %p413 = scmp.eq.s32.totalorder %s41, 0
      %p414 = por %p412, %p413
      %s416 = sadd.s32 %s415, 1
      %p419 = scmp.eq.s32.totalorder %s35, 1
      %p420 = scmp.ne.s32.totalorder %s415, %s417
      %p421 = scmp.eq.s32.totalorder %s35, 0
      %p422 = por %p420, %p421
      %p423 = scmp.ne.s32.totalorder %s415, %s417
      %p424 = scmp.eq.s32.totalorder %s40, 1
      %p425 = por %p423, %p424
      %p426 = scmp.ne.s32.totalorder %s417, %s418
      %p427 = scmp.eq.s32.totalorder %s40, 0
      %p428 = por %p426, %p427
      %p429 = scmp.ne.s32.totalorder %s417, %s418
      %p430 = scmp.eq.s32.totalorder %s41, 1
      %p431 = por %p429, %p430
      %p433 = scmp.ne.s32.totalorder %s418, %s432
      %p434 = scmp.eq.s32.totalorder %s41, 0
      %p435 = por %p433, %p434
      %s437 = sadd.s32 %s436, 1
      %p440 = scmp.eq.s32.totalorder %s35, 1
      %p441 = scmp.ne.s32.totalorder %s436, %s438
      %p442 = scmp.eq.s32.totalorder %s35, 0
      %p443 = por %p441, %p442
      %p444 = scmp.ne.s32.totalorder %s436, %s438
      %p445 = scmp.eq.s32.totalorder %s40, 1
      %p446 = por %p444, %p445
      %p447 = scmp.ne.s32.totalorder %s438, %s439
      %p448 = scmp.eq.s32.totalorder %s40, 0
      %p449 = por %p447, %p448
      %p450 = scmp.ne.s32.totalorder %s438, %s439
      %p451 = scmp.eq.s32.totalorder %s41, 1
      %p452 = por %p450, %p451
      %p454 = scmp.ne.s32.totalorder %s439, %s453
      %p455 = scmp.eq.s32.totalorder %s41, 0
      %p456 = por %p454, %p455
      %s458 = sadd.s32 %s457, 1
      %p461 = scmp.eq.s32.totalorder %s35, 1
      %p462 = scmp.ne.s32.totalorder %s457, %s459
      %p463 = scmp.eq.s32.totalorder %s35, 0
      %p464 = por %p462, %p463
      %p465 = scmp.ne.s32.totalorder %s457, %s459
      %p466 = scmp.eq.s32.totalorder %s40, 1
      %p467 = por %p465, %p466
      %p468 = scmp.ne.s32.totalorder %s459, %s460
      %p469 = scmp.eq.s32.totalorder %s40, 0
      %p470 = por %p468, %p469
      %p471 = scmp.ne.s32.totalorder %s459, %s460
      %p472 = scmp.eq.s32.totalorder %s41, 1
      %p473 = por %p471, %p472
      %p475 = scmp.ne.s32.totalorder %s460, %s474
      %p476 = scmp.eq.s32.totalorder %s41, 0
      %p477 = por %p475, %p476
      %s479 = sadd.s32 %s478, 1
      %p482 = scmp.eq.s32.totalorder %s35, 1
      %p483 = scmp.ne.s32.totalorder %s478, %s480
      %p484 = scmp.eq.s32.totalorder %s35, 0
      %p485 = por %p483, %p484
      %p486 = scmp.ne.s32.totalorder %s478, %s480
      %p487 = scmp.eq.s32.totalorder %s40, 1
      %p488 = por %p486, %p487
      %p489 = scmp.ne.s32.totalorder %s480, %s481
      %p490 = scmp.eq.s32.totalorder %s40, 0
      %p491 = por %p489, %p490
      %p492 = scmp.ne.s32.totalorder %s480, %s481
      %p493 = scmp.eq.s32.totalorder %s41, 1
      %p494 = por %p492, %p493
      %p496 = scmp.ne.s32.totalorder %s481, %s495
      %p497 = scmp.eq.s32.totalorder %s41, 0
      %p498 = por %p496, %p497
      %s499 = ssub.s32 %s42, %s54
      %s500 = ssub.s32 %s43, %s50
      %s501 = sor.u32 %s499, %s500
      %p502 = scmp.eq.s32.totalorder %s501, 0
      %s504 = sadd.s32 %s503, 1
      %s505 = scalar_select %p502, %s503, %s504
      %p508 = pneg %p502
      %p509 = scmp.eq.s32.totalorder %s35, 1
      %p510 = por %p508, %p509
      %p511 = scmp.ne.s32.totalorder %s503, %s506
      %p512 = scmp.eq.s32.totalorder %s35, 0
      %p513 = por %p511, %p512
      %p514 = scmp.ne.s32.totalorder %s503, %s506
      %p515 = scmp.eq.s32.totalorder %s40, 1
      %p516 = por %p514, %p515
      %p517 = scmp.ne.s32.totalorder %s506, %s507
      %p518 = scmp.eq.s32.totalorder %s40, 0
      %p519 = por %p517, %p518
      %p520 = scmp.ne.s32.totalorder %s506, %s507
      %p521 = scmp.eq.s32.totalorder %s41, 1
      %p522 = por %p520, %p521
      %p524 = scmp.ne.s32.totalorder %s507, %s523
      %p525 = scmp.eq.s32.totalorder %s41, 0
      %p526 = por %p524, %p525
      %p527 = scmp.le.s32.totalorder 1, %s35
      %p528 = scmp.lt.s32.totalorder %s35, 3
      %p529 = pnand %p527, %p528
      %p530 = pneg %p529
      // Predicated region
      $region9: #{tpu_custom_call.1} parent=5 // pred_check
        _
      $region10: #{tpu_custom_call.1} parent=5 // pred_check_branch
        %532 = sbr.rel (%p529) target = $region12
      $region11: #{tpu_custom_call.1} parent=5 // pred_region
        %s533 = ssub.s32 %s35, 1
        // Predicated region
        $region13: #{tpu_custom_call.1} parent=11 // pred_check
          %p534 = pneg %p68
        $region14: #{tpu_custom_call.1} parent=11 // pred_check_branch
          %536 = sbr.rel (%p534) target = $region16
        $region15: #{tpu_custom_call.1} parent=11 // pred_region
          _
        $region16: #{tpu_custom_call.1} parent=11 // pred_fallthru
          _
        // Predicated region
        $region17: #{tpu_custom_call.1} parent=11 // pred_check
          %p537 = pneg %p89
        $region18: #{tpu_custom_call.1} parent=11 // pred_check_branch
          %539 = sbr.rel (%p537) target = $region20
        $region19: #{tpu_custom_call.1} parent=11 // pred_region
          _
        $region20: #{tpu_custom_call.1} parent=11 // pred_fallthru
          _
        // Predicated region
        $region21: #{tpu_custom_call.1} parent=11 // pred_check
          %p540 = pneg %p218
        $region22: #{tpu_custom_call.1} parent=11 // pred_check_branch
          %542 = sbr.rel (%p540) target = $region24
        $region23: #{tpu_custom_call.1} parent=11 // pred_region
          _
        $region24: #{tpu_custom_call.1} parent=11 // pred_fallthru
          _
        // Predicated region
        $region25: #{tpu_custom_call.1} parent=11 // pred_check
          %p543 = pneg %p239
        $region26: #{tpu_custom_call.1} parent=11 // pred_check_branch
          %545 = sbr.rel (%p543) target = $region28
        $region27: #{tpu_custom_call.1} parent=11 // pred_region
          _
        $region28: #{tpu_custom_call.1} parent=11 // pred_fallthru
          _
        // Predicated region
        $region29: #{tpu_custom_call.1} parent=11 // pred_check
          %p546 = pneg %p260
        $region30: #{tpu_custom_call.1} parent=11 // pred_check_branch
          %548 = sbr.rel (%p546) target = $region32
        $region31: #{tpu_custom_call.1} parent=11 // pred_region
          _
        $region32: #{tpu_custom_call.1} parent=11 // pred_fallthru
          _
        // Predicated region
        $region33: #{tpu_custom_call.1} parent=11 // pred_check
          %p549 = pneg %p281
        $region34: #{tpu_custom_call.1} parent=11 // pred_check_branch
          %551 = sbr.rel (%p549) target = $region36
        $region35: #{tpu_custom_call.1} parent=11 // pred_region
          _
        $region36: #{tpu_custom_call.1} parent=11 // pred_fallthru
          _
        // Predicated region
        $region37: #{tpu_custom_call.1} parent=11 // pred_check
          %p552 = pneg %p302
        $region38: #{tpu_custom_call.1} parent=11 // pred_check_branch
          %554 = sbr.rel (%p552) target = $region40
        $region39: #{tpu_custom_call.1} parent=11 // pred_region
          _
        $region40: #{tpu_custom_call.1} parent=11 // pred_fallthru
          _
        // Predicated region
        $region41: #{tpu_custom_call.1} parent=11 // pred_check
          %p555 = pneg %p323
        $region42: #{tpu_custom_call.1} parent=11 // pred_check_branch
          %557 = sbr.rel (%p555) target = $region44
        $region43: #{tpu_custom_call.1} parent=11 // pred_region
          _
        $region44: #{tpu_custom_call.1} parent=11 // pred_fallthru
          _
        // Predicated region
        $region45: #{tpu_custom_call.1} parent=11 // pred_check
          %p558 = pneg %p344
        $region46: #{tpu_custom_call.1} parent=11 // pred_check_branch
          %560 = sbr.rel (%p558) target = $region48
        $region47: #{tpu_custom_call.1} parent=11 // pred_region
          _
        $region48: #{tpu_custom_call.1} parent=11 // pred_fallthru
          _
        // Predicated region
        $region49: #{tpu_custom_call.1} parent=11 // pred_check
          %p561 = pneg %p365
        $region50: #{tpu_custom_call.1} parent=11 // pred_check_branch
          %563 = sbr.rel (%p561) target = $region52
        $region51: #{tpu_custom_call.1} parent=11 // pred_region
          _
        $region52: #{tpu_custom_call.1} parent=11 // pred_fallthru
          _
        // Predicated region
        $region53: #{tpu_custom_call.1} parent=11 // pred_check
          %p564 = pneg %p386
        $region54: #{tpu_custom_call.1} parent=11 // pred_check_branch
          %566 = sbr.rel (%p564) target = $region56
        $region55: #{tpu_custom_call.1} parent=11 // pred_region
          _
        $region56: #{tpu_custom_call.1} parent=11 // pred_fallthru
          _
        // Predicated region
        $region57: #{tpu_custom_call.1} parent=11 // pred_check
          %p567 = pneg %p407
        $region58: #{tpu_custom_call.1} parent=11 // pred_check_branch
          %569 = sbr.rel (%p567) target = $region60
        $region59: #{tpu_custom_call.1} parent=11 // pred_region
          _
        $region60: #{tpu_custom_call.1} parent=11 // pred_fallthru
          _
        // Predicated region
        $region61: #{tpu_custom_call.1} parent=11 // pred_check
          %p570 = pneg %p428
        $region62: #{tpu_custom_call.1} parent=11 // pred_check_branch
          %572 = sbr.rel (%p570) target = $region64
        $region63: #{tpu_custom_call.1} parent=11 // pred_region
          _
        $region64: #{tpu_custom_call.1} parent=11 // pred_fallthru
          _
        // Predicated region
        $region65: #{tpu_custom_call.1} parent=11 // pred_check
          %p573 = pneg %p449
        $region66: #{tpu_custom_call.1} parent=11 // pred_check_branch
          %575 = sbr.rel (%p573) target = $region68
        $region67: #{tpu_custom_call.1} parent=11 // pred_region
          _
        $region68: #{tpu_custom_call.1} parent=11 // pred_fallthru
          _
        // Predicated region
        $region69: #{tpu_custom_call.1} parent=11 // pred_check
          %p576 = pneg %p470
        $region70: #{tpu_custom_call.1} parent=11 // pred_check_branch
          %578 = sbr.rel (%p576) target = $region72
        $region71: #{tpu_custom_call.1} parent=11 // pred_region
          _
        $region72: #{tpu_custom_call.1} parent=11 // pred_fallthru
          _
        // Predicated region
        $region73: #{tpu_custom_call.1} parent=11 // pred_check
          %p579 = pneg %p491
        $region74: #{tpu_custom_call.1} parent=11 // pred_check_branch
          %581 = sbr.rel (%p579) target = $region76
        $region75: #{tpu_custom_call.1} parent=11 // pred_region
          _
        $region76: #{tpu_custom_call.1} parent=11 // pred_fallthru
          _
      $region12: #{tpu_custom_call.1} parent=5 // pred_fallthru
        _
      %p582 = scmp.lt.s32.totalorder %s35, 2
      // Predicated region
      $region77: #{tpu_custom_call.1} parent=5 // pred_check
        %p583 = pneg %p582
      $region78: #{tpu_custom_call.1} parent=5 // pred_check_branch
        %585 = sbr.rel (%p583) target = $region80
      $region79: #{tpu_custom_call.1} parent=5 // pred_region
        // Predicated region
        $region81: #{tpu_custom_call.1} parent=79 // pred_check
          %p586 = pneg %p111
        $region82: #{tpu_custom_call.1} parent=79 // pred_check_branch
          %588 = sbr.rel (%p586) target = $region84
        $region83: #{tpu_custom_call.1} parent=79 // pred_region
          %p589 = scmp.lt.s32.totalorder %s42, 1
          %s590 = scalar_select %p589, %s42, 1
          %p591 = scmp.lt.s32.totalorder %s43, 0
          %s592 = scalar_select %p591, %s43, 0
          %s593 = sadd.s32 %s592, %s590
          %s594 = smul.addr %s593, 8
          %s595 = scalar_lea.vmem %s2, %s594
        $region84: #{tpu_custom_call.1} parent=79 // pred_fallthru
          _
        // Predicated region
        $region85: #{tpu_custom_call.1} parent=79 // pred_check
          %p596 = pneg %p137
        $region86: #{tpu_custom_call.1} parent=79 // pred_check_branch
          %598 = sbr.rel (%p596) target = $region88
        $region87: #{tpu_custom_call.1} parent=79 // pred_region
          %s599 = sand.u32 %s127, 1
          %s600 = scalar_lea.sflag [#allocation5], %s599
          %s601 = sand.u32 %s127, 1
          %s602 = smul.addr %s601, 4
          %s603 = scalar_lea.vmem [#allocation4], %s602
          %s605 = ssub.s32 64, 64
          %606 = vsyncadd %s600, %s605
          %s607 = smul.addr %s42, 64
          %s608 = scalar_lea.hbm %s3, %s607
          %s610 = sshll.u32 %s603, 4
          %s611 = int_to_ptr.vmem [resolvable:$true] %s610
          %613 = dma.hbm_to_vmem [thread:$0]  %s608, 64, %s611, %s600
        $region88: #{tpu_custom_call.1} parent=79 // pred_fallthru
          _
        // Predicated region
        $region89: #{tpu_custom_call.1} parent=79 // pred_check
          %p614 = pneg %p163
        $region90: #{tpu_custom_call.1} parent=79 // pred_check_branch
          %616 = sbr.rel (%p614) target = $region92
        $region91: #{tpu_custom_call.1} parent=79 // pred_region
          %s617 = sand.u32 %s35, 1
          %s618 = scalar_lea.sflag [#allocation8], %s617
          %s619 = sand.u32 %s153, 1
          %s620 = smul.addr %s619, 4
          %s621 = scalar_lea.vmem [#allocation7], %s620
          %s623 = ssub.s32 64, 64
          %624 = vsyncadd %s618, %s623
          %s625 = smul.addr %s42, 64
          %s626 = scalar_lea.hbm %s4, %s625
          %s628 = sshll.u32 %s621, 4
          %s629 = int_to_ptr.vmem [resolvable:$true] %s628
          %631 = dma.hbm_to_vmem [thread:$0]  %s626, 64, %s629, %s618
        $region92: #{tpu_custom_call.1} parent=79 // pred_fallthru
          _
        // Predicated region
        $region93: #{tpu_custom_call.1} parent=79 // pred_check
          %p632 = pneg %p191
        $region94: #{tpu_custom_call.1} parent=79 // pred_check_branch
          %634 = sbr.rel (%p632) target = $region96
        $region95: #{tpu_custom_call.1} parent=79 // pred_region
          %s635 = sand.u32 %s35, 1
          %s636 = scalar_lea.sflag [#allocation8], %s635
          %s637 = sand.u32 %s181, 1
          %s638 = smul.addr %s637, 4
          %s639 = scalar_lea.vmem [#allocation9], %s638
          %s641 = ssub.s32 64, 64
          %642 = vsyncadd %s636, %s641
          %s643 = sadd.s32 %s43, %s42
          %s644 = smul.addr %s643, 64
          %s645 = scalar_lea.hbm %s5, %s644
          %s647 = sshll.u32 %s639, 4
          %s648 = int_to_ptr.vmem [resolvable:$true] %s647
          %650 = dma.hbm_to_vmem [thread:$0]  %s645, 64, %s648, %s636
        $region96: #{tpu_custom_call.1} parent=79 // pred_fallthru
          _
      $region80: #{tpu_custom_call.1} parent=5 // pred_fallthru
        _
      %p651 = scmp.le.s32.totalorder 1, %s35
      %p652 = scmp.lt.s32.totalorder %s35, 3
      %p653 = pnand %p651, %p652
      %p654 = pneg %p653
      // Predicated region
      $region97: #{tpu_custom_call.1} parent=5 // pred_check
        _
      $region98: #{tpu_custom_call.1} parent=5 // pred_check_branch
        %656 = sbr.rel (%p653) target = $region100
      $region99: #{tpu_custom_call.1} parent=5 // pred_region
        %s657 = ssub.s32 %s35, 1
        %s658 = sand.u32 %s130, 1
        %s659 = scalar_lea.sflag [#allocation5], %s658
        %s660 = sand.u32 %s130, 1
        %s661 = smul.addr %s660, 4
        %s662 = scalar_lea.vmem [#allocation4], %s661
        // Predicated region
        $region101: #{tpu_custom_call.1} parent=99 // pred_check
          %p663 = pneg %p143
        $region102: #{tpu_custom_call.1} parent=99 // pred_check_branch
          %665 = sbr.rel (%p663) target = $region104
        $region103: #{tpu_custom_call.1} parent=99 // pred_region
          %666 = dma.done %s659, 64
        $region104: #{tpu_custom_call.1} parent=99 // pred_fallthru
          _
        %s667 = sand.u32 %s40, 1
        %s668 = scalar_lea.sflag [#allocation8], %s667
        %s669 = sand.u32 %s156, 1
        %s670 = smul.addr %s669, 4
        %s671 = scalar_lea.vmem [#allocation7], %s670
        // Predicated region
        $region105: #{tpu_custom_call.1} parent=99 // pred_check
          %p672 = pneg %p169
        $region106: #{tpu_custom_call.1} parent=99 // pred_check_branch
          %674 = sbr.rel (%p672) target = $region108
        $region107: #{tpu_custom_call.1} parent=99 // pred_region
          %675 = dma.done %s668, 64
        $region108: #{tpu_custom_call.1} parent=99 // pred_fallthru
          _
        %s676 = sand.u32 %s40, 1
        %s677 = scalar_lea.sflag [#allocation8], %s676
        %s678 = sand.u32 %s184, 1
        %s679 = smul.addr %s678, 4
        %s680 = scalar_lea.vmem [#allocation9], %s679
        // Predicated region
        $region109: #{tpu_custom_call.1} parent=99 // pred_check
          %p681 = pneg %p197
        $region110: #{tpu_custom_call.1} parent=99 // pred_check_branch
          %683 = sbr.rel (%p681) target = $region112
        $region111: #{tpu_custom_call.1} parent=99 // pred_region
          %684 = dma.done %s677, 64
        $region112: #{tpu_custom_call.1} parent=99 // pred_fallthru
          _
        %p685 = pneg %p68
        %p686 = pneg %p65
        %p687 = pneg %p89
        %p688 = pneg %p86
        %p689 = scmp.lt.s32.totalorder %s44, 1
        %s690 = scalar_select %p689, %s44, 1
        %p691 = scmp.lt.s32.totalorder %s45, 0
        %s692 = scalar_select %p691, %s45, 0
        %s693 = sadd.s32 %s692, %s690
        %s694 = smul.addr %s693, 8
        %s695 = scalar_lea.vmem %s2, %s694
        %p696 = pneg %p117
        %p697 = pneg %p114
        %s698 = sand.u32 %s130, 1
        %s699 = scalar_lea.sflag [#allocation5], %s698
        %s700 = sand.u32 %s130, 1
        %s701 = smul.addr %s700, 4
        %s702 = scalar_lea.vmem [#allocation4], %s701
        %p703 = pneg %p143
        %p704 = pneg %p140
        %s705 = sand.u32 %s40, 1
        %s706 = scalar_lea.sflag [#allocation8], %s705
        %s707 = sand.u32 %s156, 1
        %s708 = smul.addr %s707, 4
        %s709 = scalar_lea.vmem [#allocation7], %s708
        %p710 = pneg %p169
        %p711 = pneg %p166
        %s712 = sand.u32 %s40, 1
        %s713 = scalar_lea.sflag [#allocation8], %s712
        %s714 = sand.u32 %s184, 1
        %s715 = smul.addr %s714, 4
        %s716 = scalar_lea.vmem [#allocation9], %s715
        %p717 = pneg %p197
        %p718 = pneg %p194
        %p719 = pneg %p218
        %p720 = pneg %p215
        %p721 = pneg %p239
        %p722 = pneg %p236
        %p723 = pneg %p260
        %p724 = pneg %p257
        %p725 = pneg %p281
        %p726 = pneg %p278
        %p727 = pneg %p302
        %p728 = pneg %p299
        %p729 = pneg %p323
        %p730 = pneg %p320
        %p731 = pneg %p344
        %p732 = pneg %p341
        %p733 = pneg %p365
        %p734 = pneg %p362
        %p735 = pneg %p386
        %p736 = pneg %p383
        %p737 = pneg %p407
        %p738 = pneg %p404
        %p739 = pneg %p428
        %p740 = pneg %p425
        %p741 = pneg %p449
        %p742 = pneg %p446
        %p743 = pneg %p470
        %p744 = pneg %p467
        %p745 = pneg %p491
        %p746 = pneg %p488
        %p747 = pneg %p519
        %p748 = pneg %p516
        %s749 = sand.u32 %s506, 1
        %s750 = scalar_lea.sflag [#allocation6], %s749
        %s751 = sand.u32 %s506, 1
        %s752 = smul.addr %s751, 8
        %s753 = scalar_lea.vmem [#allocation10], %s752
        %p754 = scmp.lt.s32.totalorder %s44, 1
        %s755 = scalar_select %p754, %s44, 1
        %p756 = scmp.lt.s32.totalorder %s45, 0
        %s757 = scalar_select %p756, %s45, 0
        %s758 = sadd.s32 %s757, %s755
        %s759 = smul.addr %s758, 8
        %s760 = scalar_lea.vmem %s2, %s759
        %v762 = vld [vmem:[%s760] sm:$0xff]
        %v763 = vld [vmem:[%s6] sm:$0xf]
        %v764 = vld [vmem:[%s6 + $0x4] sm:$0xf]
        %v765 = vld [vmem:[%s6 + $0x8] sm:$0xf]
        %v766 = vld [vmem:[%s6 + $0xc] sm:$0xf]
        %v767 = vld [vmem:[%s8] sm:$0xf]
        %v768 = vld [vmem:[%s8 + $0x4] sm:$0xf]
        %v769 = vld [vmem:[%s8 + $0x8] sm:$0xf]
        %v770 = vld [vmem:[%s8 + $0xc] sm:$0xf]
        %v771 = vld [vmem:[%s7] sm:$0x1]
        %v772 = vld [vmem:[%s9] sm:$0x1]
        %p773 = scmp.eq.s32.totalorder %s45, 0
        // Predicated region
        $region113: #{tpu_custom_call.1} parent=99 // pred_check
          %p774 = pneg %p773
        $region114: #{tpu_custom_call.1} parent=99 // pred_check_branch
          %776 = sbr.rel (%p774) target = $region116
        $region115: #{tpu_custom_call.1} parent=99 // pred_region
          %v777 = vld [vmem:[%s662] sm:$0xf]
          %v779 = vlaneseq
          %v780 = vshrl.u32 %v779, 7
          %v781 = vsub.s32 0, %v780
          %v782 = vrot.slane %v771, %v781
          %v788 = vunpack.c.l.b16 %v763
          %v789 = vunpack.c.l.b16 %v764
          %v790 = vunpack.c.l.b16 %v765
          %v791 = vunpack.c.l.b16 %v766
          %v792 = vpack.c.b16 %v789, %v788
          %v793 = vpack.c.b16 %v791, %v790
          %vm796 = vcmask 261120
          %v798 = vsel %vm796, %v777, 0
          %800 = vmatprep.subr.bf16.mxu0 0
          %801 = vmatpush1.bf16.msra.mxu0 %v792
          %802 = vmatprep.subr.bf16.mxu0 0
          %803 = vmatpush1.bf16.msra.mxu0 %v793
          %804 = vmatprep.subr.bf16.mxu0 0
          %805 = vmatpush1.bf16.msra.mxu0 0
          %806 = vmatprep.subr.bf16.mxu0 0
          %807 = vmatpush1.bf16.msra.mxu0 0
          %808 = vmatprep.subr.bf16.mxu0 0
          %809 = vmatpush1.bf16.msra.mxu0 0
          %810 = vmatprep.subr.bf16.mxu0 0
          %811 = vmatpush1.bf16.msra.mxu0 0
          %812 = vmatprep.subr.bf16.mxu0 0
          %813 = vmatpush1.bf16.msra.mxu0 0
          %814 = vmatprep.subr.bf16.mxu0 0
          %815 = vmatpush1.bf16.msra.mxu0 0
          %816 = vmatprep.subr.bf16.mxu0 0
          %817 = vmatpush1.bf16.msra.mxu0 0
          %818 = vmatprep.subr.bf16.mxu0 0
          %819 = vmatpush1.bf16.msra.mxu0 0
          %820 = vmatprep.subr.bf16.mxu0 0
          %821 = vmatpush1.bf16.msra.mxu0 0
          %822 = vmatprep.subr.bf16.mxu0 0
          %823 = vmatpush1.bf16.msra.mxu0 0
          %824 = vmatprep.subr.bf16.mxu0 0
          %825 = vmatpush1.bf16.msra.mxu0 0
          %826 = vmatprep.subr.bf16.mxu0 0
          %827 = vmatpush1.bf16.msra.mxu0 0
          %828 = vmatprep.subr.bf16.mxu0 0
          %829 = vmatpush1.bf16.msra.mxu0 0
          %830 = vmatprep.subr.bf16.mxu0 0
          %831 = vmatpush1.bf16.msra.mxu0 0
          %832 = vmatprep.mubr.bf16.mxu0 0
          %833 = vmatmul.mubr.bf16.gmra.mrb[0].mxu0 %v798
          %v834 = vpop.f32.mrb[0].mxu0
          %v835 = vadd.f32 %v782, %v834
          %v836 = vpop.f32.mrb[0].mxu0
          %v837 = vpop.f32.mrb[0].mxu0
          %v838 = vpop.f32.mrb[0].mxu0
          %839 = vdwg.mxu0
          %v840 = vld [vmem:[%s671] sm:$0xf]
          %v842 = vlaneseq
          %v843 = vshrl.u32 %v842, 7
          %v844 = vsub.s32 0, %v843
          %v845 = vrot.slane %v772, %v844
          %v851 = vunpack.c.l.b16 %v767
          %v852 = vunpack.c.l.b16 %v768
          %v853 = vunpack.c.l.b16 %v769
          %v854 = vunpack.c.l.b16 %v770
          %v855 = vpack.c.b16 %v852, %v851
          %v856 = vpack.c.b16 %v854, %v853
          %v860 = vsel %vm796, %v840, 0
          %862 = vmatprep.subr.bf16.mxu0 0
          %863 = vmatpush1.bf16.msra.mxu0 %v855
          %864 = vmatprep.subr.bf16.mxu0 0
          %865 = vmatpush1.bf16.msra.mxu0 %v856
          %866 = vmatprep.subr.bf16.mxu0 0
          %867 = vmatpush1.bf16.msra.mxu0 0
          %868 = vmatprep.subr.bf16.mxu0 0
          %869 = vmatpush1.bf16.msra.mxu0 0
          %870 = vmatprep.subr.bf16.mxu0 0
          %871 = vmatpush1.bf16.msra.mxu0 0
          %872 = vmatprep.subr.bf16.mxu0 0
          %873 = vmatpush1.bf16.msra.mxu0 0
          %874 = vmatprep.subr.bf16.mxu0 0
          %875 = vmatpush1.bf16.msra.mxu0 0
          %876 = vmatprep.subr.bf16.mxu0 0
          %877 = vmatpush1.bf16.msra.mxu0 0
          %878 = vmatprep.subr.bf16.mxu0 0
          %879 = vmatpush1.bf16.msra.mxu0 0
          %880 = vmatprep.subr.bf16.mxu0 0
          %881 = vmatpush1.bf16.msra.mxu0 0
          %882 = vmatprep.subr.bf16.mxu0 0
          %883 = vmatpush1.bf16.msra.mxu0 0
          %884 = vmatprep.subr.bf16.mxu0 0
          %885 = vmatpush1.bf16.msra.mxu0 0
          %886 = vmatprep.subr.bf16.mxu0 0
          %887 = vmatpush1.bf16.msra.mxu0 0
          %888 = vmatprep.subr.bf16.mxu0 0
          %889 = vmatpush1.bf16.msra.mxu0 0
          %890 = vmatprep.subr.bf16.mxu0 0
          %891 = vmatpush1.bf16.msra.mxu0 0
          %892 = vmatprep.subr.bf16.mxu0 0
          %893 = vmatpush1.bf16.msra.mxu0 0
          %894 = vmatprep.mubr.bf16.mxu0 0
          %895 = vmatmul.mubr.bf16.gmra.mrb[0].mxu0 %v860
          %v896 = vpop.f32.mrb[0].mxu0
          %v897 = vadd.f32 %v845, %v896
          %v898 = vpop.f32.mrb[0].mxu0
          %v899 = vpop.f32.mrb[0].mxu0
          %v900 = vpop.f32.mrb[0].mxu0
          %901 = vdwg.mxu0
          %v902 = vpack.c.bf16 %v835, %v835
          %vm903 = vcmask 257024
          %904 = vst.msk [vmem:[#allocation2] sm:$0xf] %vm903, %v902
          %v905 = vpack.c.bf16 %v897, %v897
          %906 = vst.msk [vmem:[#allocation3] sm:$0xf] %vm903, %v905
        $region116: #{tpu_custom_call.1} parent=99 // pred_fallthru
          _
        %v907 = vpack.c.bf16 %v762, %v762
        %v909 = vlaneseq
        %v910 = vshrl.u32 %v909, 7
        %v911 = vsub.s32 0, %v910
        %v912 = vrot.slane %v771, %v911
        %v918 = vunpack.c.l.b16 %v763
        %v919 = vunpack.c.l.b16 %v764
        %v920 = vunpack.c.l.b16 %v765
        %v921 = vunpack.c.l.b16 %v766
        %v922 = vpack.c.b16 %v919, %v918
        %v923 = vpack.c.b16 %v921, %v920
        %vm926 = vcmask 261120
        %v928 = vsel %vm926, %v907, 0
        %930 = vmatprep.subr.bf16.mxu0 0
        %931 = vmatpush1.bf16.msra.mxu0 %v922
        %932 = vmatprep.subr.bf16.mxu0 0
        %933 = vmatpush1.bf16.msra.mxu0 %v923
        %934 = vmatprep.subr.bf16.mxu0 0
        %935 = vmatpush1.bf16.msra.mxu0 0
        %936 = vmatprep.subr.bf16.mxu0 0
        %937 = vmatpush1.bf16.msra.mxu0 0
        %938 = vmatprep.subr.bf16.mxu0 0
        %939 = vmatpush1.bf16.msra.mxu0 0
        %940 = vmatprep.subr.bf16.mxu0 0
        %941 = vmatpush1.bf16.msra.mxu0 0
        %942 = vmatprep.subr.bf16.mxu0 0
        %943 = vmatpush1.bf16.msra.mxu0 0
        %944 = vmatprep.subr.bf16.mxu0 0
        %945 = vmatpush1.bf16.msra.mxu0 0
        %946 = vmatprep.subr.bf16.mxu0 0
        %947 = vmatpush1.bf16.msra.mxu0 0
        %948 = vmatprep.subr.bf16.mxu0 0
        %949 = vmatpush1.bf16.msra.mxu0 0
        %950 = vmatprep.subr.bf16.mxu0 0
        %951 = vmatpush1.bf16.msra.mxu0 0
        %952 = vmatprep.subr.bf16.mxu0 0
        %953 = vmatpush1.bf16.msra.mxu0 0
        %954 = vmatprep.subr.bf16.mxu0 0
        %955 = vmatpush1.bf16.msra.mxu0 0
        %956 = vmatprep.subr.bf16.mxu0 0
        %957 = vmatpush1.bf16.msra.mxu0 0
        %958 = vmatprep.subr.bf16.mxu0 0
        %959 = vmatpush1.bf16.msra.mxu0 0
        %960 = vmatprep.subr.bf16.mxu0 0
        %961 = vmatpush1.bf16.msra.mxu0 0
        %962 = vmatprep.mubr.bf16.mxu0 0
        %963 = vmatmul.mubr.bf16.gmra.mrb[0].mxu0 %v928
        %v964 = vpop.f32.mrb[0].mxu0
        %v965 = vadd.f32 %v912, %v964
        %v966 = vpop.f32.mrb[0].mxu0
        %v967 = vpop.f32.mrb[0].mxu0
        %v968 = vpop.f32.mrb[0].mxu0
        %969 = vdwg.mxu0
        %v970 = vmul.f32 %v965, 0.35355338
        %v971 = vpack.c.bf16 %v970, %v970
        %v972 = vld [vmem:[#allocation2] sm:$0xf]
        %v973 = vld [vmem:[#allocation3] sm:$0xf]
        %v974 = vld [vmem:[%s680] sm:$0xf]
        %v975 = vunpack.c.l.bf16 %v974
        %s976 = smul.u32 %s45, 8
        %v977 = vlaneseq
        %v978 = vshrl.u32 %v977, 7
        %v979 = vstv %s976
        %v980 = vadd.s32 %v979, %v978
        %v981 = vlaneseq
        %v982 = vand.u32 %v981, 127
        %v983 = vsub.s32 %v982, %v980
        %vm984 = vcmp.lt.s32.totalorder %v983, 0
        %v985 = vsub.s32 %v980, %v982
        %vm986 = vcmp.lt.s32.totalorder %v985, 0
        %v987 = vsub.s32 0, %v985
        %v988 = vsel %vm986, %v987, %v985
        %v989 = vcvt.s32.f32 %v988
        %v990 = vld [vmem:[%s0] sm:$0xf]
        %v991 = vld [vmem:[%s1] sm:$0xf]
        %v992 = vld [vmem:[%s10] sm:$0xf]
        %v993 = vld [vmem:[%s10 + $0x4] sm:$0xf]
        %v994 = vld [vmem:[%s10 + $0x8] sm:$0xf]
        %v995 = vld [vmem:[%s10 + $0xc] sm:$0xf]
        %vm996 = vcmask 64512
        %v998 = vsel %vm996, %v971, 0
        %v1001 = vsel %vm996, %v972, 0
        %1003 = vmatprep.subr.bf16.mxu0 0
        %1004 = vmatpush1.bf16.xpose.msra.mxu0 %v1001
        %1005 = vmatprep.subr.bf16.mxu0 0
        %1006 = vmatpush1.bf16.xpose.msra.mxu0 0
        %1007 = vmatprep.subr.bf16.mxu0 0
        %1008 = vmatpush1.bf16.xpose.msra.mxu0 0
        %1009 = vmatprep.subr.bf16.mxu0 0
        %1010 = vmatpush1.bf16.xpose.msra.mxu0 0
        %1011 = vmatprep.subr.bf16.mxu0 0
        %1012 = vmatpush1.bf16.xpose.msra.mxu0 0
        %1013 = vmatprep.subr.bf16.mxu0 0
        %1014 = vmatpush1.bf16.xpose.msra.mxu0 0
        %1015 = vmatprep.subr.bf16.mxu0 0
        %1016 = vmatpush1.bf16.xpose.msra.mxu0 0
        %1017 = vmatprep.subr.bf16.mxu0 0
        %1018 = vmatpush1.bf16.xpose.msra.mxu0 0
        %1019 = vmatprep.subr.bf16.mxu0 0
        %1020 = vmatpush1.bf16.xpose.msra.mxu0 0
        %1021 = vmatprep.subr.bf16.mxu0 0
        %1022 = vmatpush1.bf16.xpose.msra.mxu0 0
        %1023 = vmatprep.subr.bf16.mxu0 0
        %1024 = vmatpush1.bf16.xpose.msra.mxu0 0
        %1025 = vmatprep.subr.bf16.mxu0 0
        %1026 = vmatpush1.bf16.xpose.msra.mxu0 0
        %1027 = vmatprep.subr.bf16.mxu0 0
        %1028 = vmatpush1.bf16.xpose.msra.mxu0 0
        %1029 = vmatprep.subr.bf16.mxu0 0
        %1030 = vmatpush1.bf16.xpose.msra.mxu0 0
        %1031 = vmatprep.subr.bf16.mxu0 0
        %1032 = vmatpush1.bf16.xpose.msra.mxu0 0
        %1033 = vmatprep.subr.bf16.mxu0 0
        %1034 = vmatpush1.bf16.xpose.msra.mxu0 0
        %1035 = vmatprep.mubr.bf16.mxu0 0
        %1036 = vmatmul.mubr.bf16.gmra.mrb[0].mxu0 %v998
        %v1037 = vpop.f32.mrb[0].mxu0
        %v1038 = vadd.f32 0.0, %v1037
        %v1039 = vpop.f32.mrb[0].mxu0
        %v1040 = vpop.f32.mrb[0].mxu0
        %v1041 = vpop.f32.mrb[0].mxu0
        %1042 = vdwg.mxu0
        %v1043 = vsub.f32 1.0, %v990
        %v1044 = vsub.f32 0.0, %v991
        %s1046 = vtos %v1044
        %v1047 = vstv %s1046
        %v1049 = vmul.f32 %v1047, %v989
        %v1050 = vmul.f32 %v1049, 1.442695
        %v1051 = vpow.pop %v1050
        %s1053 = vtos %v1043
        %v1054 = vstv %s1053
        %v1056 = vmul.f32 %v1054, %v1051
        %s1058 = vtos %v990
        %v1059 = vstv %s1058
        %v1061 = vadd.f32 %v1059, %v1056
        %v1062 = vmul.f32 %v1038, %v975
        %v1063 = vmul.f32 %v1062, %v1061
        %v1064 = vsel %vm984, %v1063, -1e+32
        %v1065 = vsel %vm996, %v1064, -inf
        %1066 = vmax.xlane.f32.xlu0 %v1065
        %v1067 = vpop.xlane.xlu0 %1066
        %v1068 = vsub.f32 %v1064, %v1067
        %v1069 = vmul.f32 %v1068, 1.442695
        %v1070 = vpow.pop %v1069
        %v1071 = vsel %vm996, %v1070, 0.0
        %1072 = vadd.xlane.f32.xlu0 %v1071
        %v1073 = vpop.xlane.xlu0 %1072
        %v1074 = vrcp.pop %v1073
        %v1075 = vmul.f32 1.0, %v1074
        %v1076 = vmul.f32 %v1070, %v1075
        %vm1077 = vcmp.eq.s32.totalorder %v980, 0
        %v1078 = vsel %vm1077, 0.0, %v1076
        %v1079 = vpack.c.bf16 %v1078, %v1078
        %v1081 = vsel %vm996, %v1079, 0
        %vm1083 = vcmask 1043456
        %v1085 = vsel %vm1083, %v973, 0
        %1087 = vmatprep.subr.bf16.mxu0 0
        %1088 = vmatpush1.bf16.msra.mxu0 %v1085
        %1089 = vmatprep.subr.bf16.mxu0 0
        %1090 = vmatpush1.bf16.msra.mxu0 0
        %1091 = vmatprep.subr.bf16.mxu0 0
        %1092 = vmatpush1.bf16.msra.mxu0 0
        %1093 = vmatprep.subr.bf16.mxu0 0
        %1094 = vmatpush1.bf16.msra.mxu0 0
        %1095 = vmatprep.subr.bf16.mxu0 0
        %1096 = vmatpush1.bf16.msra.mxu0 0
        %1097 = vmatprep.subr.bf16.mxu0 0
        %1098 = vmatpush1.bf16.msra.mxu0 0
        %1099 = vmatprep.subr.bf16.mxu0 0
        %1100 = vmatpush1.bf16.msra.mxu0 0
        %1101 = vmatprep.subr.bf16.mxu0 0
        %1102 = vmatpush1.bf16.msra.mxu0 0
        %1103 = vmatprep.subr.bf16.mxu0 0
        %1104 = vmatpush1.bf16.msra.mxu0 0
        %1105 = vmatprep.subr.bf16.mxu0 0
        %1106 = vmatpush1.bf16.msra.mxu0 0
        %1107 = vmatprep.subr.bf16.mxu0 0
        %1108 = vmatpush1.bf16.msra.mxu0 0
        %1109 = vmatprep.subr.bf16.mxu0 0
        %1110 = vmatpush1.bf16.msra.mxu0 0
        %1111 = vmatprep.subr.bf16.mxu0 0
        %1112 = vmatpush1.bf16.msra.mxu0 0
        %1113 = vmatprep.subr.bf16.mxu0 0
        %1114 = vmatpush1.bf16.msra.mxu0 0
        %1115 = vmatprep.subr.bf16.mxu0 0
        %1116 = vmatpush1.bf16.msra.mxu0 0
        %1117 = vmatprep.subr.bf16.mxu0 0
        %1118 = vmatpush1.bf16.msra.mxu0 0
        %1119 = vmatprep.mubr.bf16.mxu0 0
        %1120 = vmatmul.mubr.bf16.gmra.mrb[0].mxu0 %v1081
        %v1121 = vpop.f32.mrb[0].mxu0
        %v1122 = vadd.f32 0.0, %v1121
        %v1123 = vpop.f32.mrb[0].mxu0
        %v1124 = vpop.f32.mrb[0].mxu0
        %v1125 = vpop.f32.mrb[0].mxu0
        %1126 = vdwg.mxu0
        %v1127 = vpack.c.bf16 %v1122, %v1122
        %1129 = vrot.lane.b32.xlu0 %v971, 120
        %v1130 = vpop.permute.xlu0 %1129
        %v1132 = vunpack.c.l.b16 %v972
        %v1133 = vpack.c.b16 %v1132, %v1132
        %1134 = vrot.lane.b32.xlu0 %v1133, 120
        %v1135 = vpop.permute.xlu0 %1134
        %v1137 = vsel %vm996, %v1130, 0
        %v1140 = vsel %vm996, %v1135, 0
        %1142 = vmatprep.subr.bf16.mxu0 0
        %1143 = vmatpush1.bf16.xpose.msra.mxu0 %v1140
        %1144 = vmatprep.subr.bf16.mxu0 0
        %1145 = vmatpush1.bf16.xpose.msra.mxu0 0
        %1146 = vmatprep.subr.bf16.mxu0 0
        %1147 = vmatpush1.bf16.xpose.msra.mxu0 0
        %1148 = vmatprep.subr.bf16.mxu0 0
        %1149 = vmatpush1.bf16.xpose.msra.mxu0 0
        %1150 = vmatprep.subr.bf16.mxu0 0
        %1151 = vmatpush1.bf16.xpose.msra.mxu0 0
        %1152 = vmatprep.subr.bf16.mxu0 0
        %1153 = vmatpush1.bf16.xpose.msra.mxu0 0
        %1154 = vmatprep.subr.bf16.mxu0 0
        %1155 = vmatpush1.bf16.xpose.msra.mxu0 0
        %1156 = vmatprep.subr.bf16.mxu0 0
        %1157 = vmatpush1.bf16.xpose.msra.mxu0 0
        %1158 = vmatprep.subr.bf16.mxu0 0
        %1159 = vmatpush1.bf16.xpose.msra.mxu0 0
        %1160 = vmatprep.subr.bf16.mxu0 0
        %1161 = vmatpush1.bf16.xpose.msra.mxu0 0
        %1162 = vmatprep.subr.bf16.mxu0 0
        %1163 = vmatpush1.bf16.xpose.msra.mxu0 0
        %1164 = vmatprep.subr.bf16.mxu0 0
        %1165 = vmatpush1.bf16.xpose.msra.mxu0 0
        %1166 = vmatprep.subr.bf16.mxu0 0
        %1167 = vmatpush1.bf16.xpose.msra.mxu0 0
        %1168 = vmatprep.subr.bf16.mxu0 0
        %1169 = vmatpush1.bf16.xpose.msra.mxu0 0
        %1170 = vmatprep.subr.bf16.mxu0 0
        %1171 = vmatpush1.bf16.xpose.msra.mxu0 0
        %1172 = vmatprep.subr.bf16.mxu0 0
        %1173 = vmatpush1.bf16.xpose.msra.mxu0 0
        %1174 = vmatprep.mubr.bf16.mxu0 0
        %1175 = vmatmul.mubr.bf16.gmra.mrb[0].mxu0 %v1137
        %v1176 = vpop.f32.mrb[0].mxu0
        %v1177 = vadd.f32 0.0, %v1176
        %v1178 = vpop.f32.mrb[0].mxu0
        %v1179 = vpop.f32.mrb[0].mxu0
        %v1180 = vpop.f32.mrb[0].mxu0
        %1181 = vdwg.mxu0
        %v1182 = vrot.slane %v1044, 1
        %s1183 = vtos %v1182
        %v1184 = vstv %s1183
        %v1186 = vmul.f32 %v1184, %v989
        %v1187 = vmul.f32 %v1186, 1.442695
        %v1188 = vpow.pop %v1187
        %v1189 = vrot.slane %v1043, 1
        %s1190 = vtos %v1189
        %v1191 = vstv %s1190
        %v1193 = vmul.f32 %v1191, %v1188
        %v1194 = vrot.slane %v990, 1
        %s1195 = vtos %v1194
        %v1196 = vstv %s1195
        %v1198 = vadd.f32 %v1196, %v1193
        %v1199 = vmul.f32 %v1177, %v975
        %v1200 = vmul.f32 %v1199, %v1198
        %v1201 = vsel %vm984, %v1200, -1e+32
        %v1202 = vsel %vm996, %v1201, -inf
        %1203 = vmax.xlane.f32.xlu0 %v1202
        %v1204 = vpop.xlane.xlu0 %1203
        %v1205 = vsub.f32 %v1201, %v1204
        %v1206 = vmul.f32 %v1205, 1.442695
        %v1207 = vpow.pop %v1206
        %v1208 = vsel %vm996, %v1207, 0.0
        %1209 = vadd.xlane.f32.xlu0 %v1208
        %v1210 = vpop.xlane.xlu0 %1209
        %v1211 = vrcp.pop %v1210
        %v1212 = vmul.f32 1.0, %v1211
        %v1213 = vmul.f32 %v1207, %v1212
        %v1214 = vsel %vm1077, 0.0, %v1213
        %v1215 = vpack.c.bf16 %v1214, %v1214
        %v1217 = vunpack.c.l.b16 %v973
        %v1218 = vpack.c.b16 %v1217, %v1217
        %1219 = vrot.lane.b32.xlu0 %v1218, 120
        %v1220 = vpop.permute.xlu0 %1219
        %v1222 = vsel %vm996, %v1215, 0
        %v1225 = vsel %vm1083, %v1220, 0
        %1227 = vmatprep.subr.bf16.mxu0 0
        %1228 = vmatpush1.bf16.msra.mxu0 %v1225
        %1229 = vmatprep.subr.bf16.mxu0 0
        %1230 = vmatpush1.bf16.msra.mxu0 0
        %1231 = vmatprep.subr.bf16.mxu0 0
        %1232 = vmatpush1.bf16.msra.mxu0 0
        %1233 = vmatprep.subr.bf16.mxu0 0
        %1234 = vmatpush1.bf16.msra.mxu0 0
        %1235 = vmatprep.subr.bf16.mxu0 0
        %1236 = vmatpush1.bf16.msra.mxu0 0
        %1237 = vmatprep.subr.bf16.mxu0 0
        %1238 = vmatpush1.bf16.msra.mxu0 0
        %1239 = vmatprep.subr.bf16.mxu0 0
        %1240 = vmatpush1.bf16.msra.mxu0 0
        %1241 = vmatprep.subr.bf16.mxu0 0
        %1242 = vmatpush1.bf16.msra.mxu0 0
        %1243 = vmatprep.subr.bf16.mxu0 0
        %1244 = vmatpush1.bf16.msra.mxu0 0
        %1245 = vmatprep.subr.bf16.mxu0 0
        %1246 = vmatpush1.bf16.msra.mxu0 0
        %1247 = vmatprep.subr.bf16.mxu0 0
        %1248 = vmatpush1.bf16.msra.mxu0 0
        %1249 = vmatprep.subr.bf16.mxu0 0
        %1250 = vmatpush1.bf16.msra.mxu0 0
        %1251 = vmatprep.subr.bf16.mxu0 0
        %1252 = vmatpush1.bf16.msra.mxu0 0
        %1253 = vmatprep.subr.bf16.mxu0 0
        %1254 = vmatpush1.bf16.msra.mxu0 0
        %1255 = vmatprep.subr.bf16.mxu0 0
        %1256 = vmatpush1.bf16.msra.mxu0 0
        %1257 = vmatprep.subr.bf16.mxu0 0
        %1258 = vmatpush1.bf16.msra.mxu0 0
        %1259 = vmatprep.mubr.bf16.mxu0 0
        %1260 = vmatmul.mubr.bf16.gmra.mrb[0].mxu0 %v1222
        %v1261 = vpop.f32.mrb[0].mxu0
        %v1262 = vadd.f32 0.0, %v1261
        %v1263 = vpop.f32.mrb[0].mxu0
        %v1264 = vpop.f32.mrb[0].mxu0
        %v1265 = vpop.f32.mrb[0].mxu0
        %1266 = vdwg.mxu0
        %v1267 = vpack.c.bf16 %v1262, %v1262
        %v1269 = vsel %vm996, %v1267, 0
        %v1272 = vsel %vm1083, %v993, 0
        %1274 = vmatprep.subr.bf16.mxu0 0
        %1275 = vmatpush1.bf16.msra.mxu0 %v1272
        %1276 = vmatprep.subr.bf16.mxu0 0
        %1277 = vmatpush1.bf16.msra.mxu0 0
        %1278 = vmatprep.subr.bf16.mxu0 0
        %1279 = vmatpush1.bf16.msra.mxu0 0
        %1280 = vmatprep.subr.bf16.mxu0 0
        %1281 = vmatpush1.bf16.msra.mxu0 0
        %1282 = vmatprep.subr.bf16.mxu0 0
        %1283 = vmatpush1.bf16.msra.mxu0 0
        %1284 = vmatprep.subr.bf16.mxu0 0
        %1285 = vmatpush1.bf16.msra.mxu0 0
        %1286 = vmatprep.subr.bf16.mxu0 0
        %1287 = vmatpush1.bf16.msra.mxu0 0
        %1288 = vmatprep.subr.bf16.mxu0 0
        %1289 = vmatpush1.bf16.msra.mxu0 0
        %1290 = vmatprep.subr.bf16.mxu0 0
        %1291 = vmatpush1.bf16.msra.mxu0 0
        %1292 = vmatprep.subr.bf16.mxu0 0
        %1293 = vmatpush1.bf16.msra.mxu0 0
        %1294 = vmatprep.subr.bf16.mxu0 0
        %1295 = vmatpush1.bf16.msra.mxu0 0
        %1296 = vmatprep.subr.bf16.mxu0 0
        %1297 = vmatpush1.bf16.msra.mxu0 0
        %1298 = vmatprep.subr.bf16.mxu0 0
        %1299 = vmatpush1.bf16.msra.mxu0 0
        %1300 = vmatprep.subr.bf16.mxu0 0
        %1301 = vmatpush1.bf16.msra.mxu0 0
        %1302 = vmatprep.subr.bf16.mxu0 0
        %1303 = vmatpush1.bf16.msra.mxu0 0
        %1304 = vmatprep.subr.bf16.mxu0 0
        %1305 = vmatpush1.bf16.msra.mxu0 0
        %1306 = vmatprep.mubr.bf16.mxu0 0
        %1307 = vmatmul.mubr.bf16.gmra.mrb[0].mxu0 %v1269
        %v1308 = vpop.f32.mrb[0].mxu0
        %v1309 = vadd.f32 0.0, %v1308
        %v1310 = vpop.f32.mrb[0].mxu0
        %v1311 = vpop.f32.mrb[0].mxu0
        %v1312 = vpop.f32.mrb[0].mxu0
        %1313 = vdwg.mxu0
        %v1315 = vsel %vm996, %v1127, 0
        %v1318 = vsel %vm1083, %v992, 0
        %1320 = vmatprep.subr.bf16.mxu0 0
        %1321 = vmatpush1.bf16.msra.mxu0 %v1318
        %1322 = vmatprep.subr.bf16.mxu0 0
        %1323 = vmatpush1.bf16.msra.mxu0 0
        %1324 = vmatprep.subr.bf16.mxu0 0
        %1325 = vmatpush1.bf16.msra.mxu0 0
        %1326 = vmatprep.subr.bf16.mxu0 0
        %1327 = vmatpush1.bf16.msra.mxu0 0
        %1328 = vmatprep.subr.bf16.mxu0 0
        %1329 = vmatpush1.bf16.msra.mxu0 0
        %1330 = vmatprep.subr.bf16.mxu0 0
        %1331 = vmatpush1.bf16.msra.mxu0 0
        %1332 = vmatprep.subr.bf16.mxu0 0
        %1333 = vmatpush1.bf16.msra.mxu0 0
        %1334 = vmatprep.subr.bf16.mxu0 0
        %1335 = vmatpush1.bf16.msra.mxu0 0
        %1336 = vmatprep.subr.bf16.mxu0 0
        %1337 = vmatpush1.bf16.msra.mxu0 0
        %1338 = vmatprep.subr.bf16.mxu0 0
        %1339 = vmatpush1.bf16.msra.mxu0 0
        %1340 = vmatprep.subr.bf16.mxu0 0
        %1341 = vmatpush1.bf16.msra.mxu0 0
        %1342 = vmatprep.subr.bf16.mxu0 0
        %1343 = vmatpush1.bf16.msra.mxu0 0
        %1344 = vmatprep.subr.bf16.mxu0 0
        %1345 = vmatpush1.bf16.msra.mxu0 0
        %1346 = vmatprep.subr.bf16.mxu0 0
        %1347 = vmatpush1.bf16.msra.mxu0 0
        %1348 = vmatprep.subr.bf16.mxu0 0
        %1349 = vmatpush1.bf16.msra.mxu0 0
        %1350 = vmatprep.subr.bf16.mxu0 0
        %1351 = vmatpush1.bf16.msra.mxu0 0
        %1352 = vmatprep.mubr.bf16.mxu0 0
        %1353 = vmatmul.mubr.bf16.gmra.mrb[0].mxu0 %v1315
        %v1354 = vpop.f32.mrb[0].mxu0
        %v1355 = vadd.f32 %v1309, %v1354
        %v1356 = vpop.f32.mrb[0].mxu0
        %v1357 = vpop.f32.mrb[0].mxu0
        %v1358 = vpop.f32.mrb[0].mxu0
        %1359 = vdwg.mxu0
        %1360 = vrot.lane.b32.xlu0 %v971, 112
        %v1361 = vpop.permute.xlu0 %1360
        %1362 = vrot.lane.b32.xlu0 %v1133, 112
        %v1363 = vpop.permute.xlu0 %1362
        %v1365 = vsel %vm996, %v1361, 0
        %v1368 = vsel %vm996, %v1363, 0
        %1370 = vmatprep.subr.bf16.mxu0 0
        %1371 = vmatpush1.bf16.xpose.msra.mxu0 %v1368
        %1372 = vmatprep.subr.bf16.mxu0 0
        %1373 = vmatpush1.bf16.xpose.msra.mxu0 0
        %1374 = vmatprep.subr.bf16.mxu0 0
        %1375 = vmatpush1.bf16.xpose.msra.mxu0 0
        %1376 = vmatprep.subr.bf16.mxu0 0
        %1377 = vmatpush1.bf16.xpose.msra.mxu0 0
        %1378 = vmatprep.subr.bf16.mxu0 0
        %1379 = vmatpush1.bf16.xpose.msra.mxu0 0
        %1380 = vmatprep.subr.bf16.mxu0 0
        %1381 = vmatpush1.bf16.xpose.msra.mxu0 0
        %1382 = vmatprep.subr.bf16.mxu0 0
        %1383 = vmatpush1.bf16.xpose.msra.mxu0 0
        %1384 = vmatprep.subr.bf16.mxu0 0
        %1385 = vmatpush1.bf16.xpose.msra.mxu0 0
        %1386 = vmatprep.subr.bf16.mxu0 0
        %1387 = vmatpush1.bf16.xpose.msra.mxu0 0
        %1388 = vmatprep.subr.bf16.mxu0 0
        %1389 = vmatpush1.bf16.xpose.msra.mxu0 0
        %1390 = vmatprep.subr.bf16.mxu0 0
        %1391 = vmatpush1.bf16.xpose.msra.mxu0 0
        %1392 = vmatprep.subr.bf16.mxu0 0
        %1393 = vmatpush1.bf16.xpose.msra.mxu0 0
        %1394 = vmatprep.subr.bf16.mxu0 0
        %1395 = vmatpush1.bf16.xpose.msra.mxu0 0
        %1396 = vmatprep.subr.bf16.mxu0 0
        %1397 = vmatpush1.bf16.xpose.msra.mxu0 0
        %1398 = vmatprep.subr.bf16.mxu0 0
        %1399 = vmatpush1.bf16.xpose.msra.mxu0 0
        %1400 = vmatprep.subr.bf16.mxu0 0
        %1401 = vmatpush1.bf16.xpose.msra.mxu0 0
        %1402 = vmatprep.mubr.bf16.mxu0 0
        %1403 = vmatmul.mubr.bf16.gmra.mrb[0].mxu0 %v1365
        %v1404 = vpop.f32.mrb[0].mxu0
        %v1405 = vadd.f32 0.0, %v1404
        %v1406 = vpop.f32.mrb[0].mxu0
        %v1407 = vpop.f32.mrb[0].mxu0
        %v1408 = vpop.f32.mrb[0].mxu0
        %1409 = vdwg.mxu0
        %v1410 = vrot.slane %v1044, 2
        %s1411 = vtos %v1410
        %v1412 = vstv %s1411
        %v1414 = vmul.f32 %v1412, %v989
        %v1415 = vmul.f32 %v1414, 1.442695
        %v1416 = vpow.pop %v1415
        %v1417 = vrot.slane %v1043, 2
        %s1418 = vtos %v1417
        %v1419 = vstv %s1418
        %v1421 = vmul.f32 %v1419, %v1416
        %v1422 = vrot.slane %v990, 2
        %s1423 = vtos %v1422
        %v1424 = vstv %s1423
        %v1426 = vadd.f32 %v1424, %v1421
        %v1427 = vmul.f32 %v1405, %v975
        %v1428 = vmul.f32 %v1427, %v1426
        %v1429 = vsel %vm984, %v1428, -1e+32
        %v1430 = vsel %vm996, %v1429, -inf
        %1431 = vmax.xlane.f32.xlu0 %v1430
        %v1432 = vpop.xlane.xlu0 %1431
        %v1433 = vsub.f32 %v1429, %v1432
        %v1434 = vmul.f32 %v1433, 1.442695
        %v1435 = vpow.pop %v1434
        %v1436 = vsel %vm996, %v1435, 0.0
        %1437 = vadd.xlane.f32.xlu0 %v1436
        %v1438 = vpop.xlane.xlu0 %1437
        %v1439 = vrcp.pop %v1438
        %v1440 = vmul.f32 1.0, %v1439
        %v1441 = vmul.f32 %v1435, %v1440
        %v1442 = vsel %vm1077, 0.0, %v1441
        %v1443 = vpack.c.bf16 %v1442, %v1442
        %1444 = vrot.lane.b32.xlu0 %v1218, 112
        %v1445 = vpop.permute.xlu0 %1444
        %v1447 = vsel %vm996, %v1443, 0
        %v1450 = vsel %vm1083, %v1445, 0
        %1452 = vmatprep.subr.bf16.mxu0 0
        %1453 = vmatpush1.bf16.msra.mxu0 %v1450
        %1454 = vmatprep.subr.bf16.mxu0 0
        %1455 = vmatpush1.bf16.msra.mxu0 0
        %1456 = vmatprep.subr.bf16.mxu0 0
        %1457 = vmatpush1.bf16.msra.mxu0 0
        %1458 = vmatprep.subr.bf16.mxu0 0
        %1459 = vmatpush1.bf16.msra.mxu0 0
        %1460 = vmatprep.subr.bf16.mxu0 0
        %1461 = vmatpush1.bf16.msra.mxu0 0
        %1462 = vmatprep.subr.bf16.mxu0 0
        %1463 = vmatpush1.bf16.msra.mxu0 0
        %1464 = vmatprep.subr.bf16.mxu0 0
        %1465 = vmatpush1.bf16.msra.mxu0 0
        %1466 = vmatprep.subr.bf16.mxu0 0
        %1467 = vmatpush1.bf16.msra.mxu0 0
        %1468 = vmatprep.subr.bf16.mxu0 0
        %1469 = vmatpush1.bf16.msra.mxu0 0
        %1470 = vmatprep.subr.bf16.mxu0 0
        %1471 = vmatpush1.bf16.msra.mxu0 0
        %1472 = vmatprep.subr.bf16.mxu0 0
        %1473 = vmatpush1.bf16.msra.mxu0 0
        %1474 = vmatprep.subr.bf16.mxu0 0
        %1475 = vmatpush1.bf16.msra.mxu0 0
        %1476 = vmatprep.subr.bf16.mxu0 0
        %1477 = vmatpush1.bf16.msra.mxu0 0
        %1478 = vmatprep.subr.bf16.mxu0 0
        %1479 = vmatpush1.bf16.msra.mxu0 0
        %1480 = vmatprep.subr.bf16.mxu0 0
        %1481 = vmatpush1.bf16.msra.mxu0 0
        %1482 = vmatprep.subr.bf16.mxu0 0
        %1483 = vmatpush1.bf16.msra.mxu0 0
        %1484 = vmatprep.mubr.bf16.mxu0 0
        %1485 = vmatmul.mubr.bf16.gmra.mrb[0].mxu0 %v1447
        %v1486 = vpop.f32.mrb[0].mxu0
        %v1487 = vadd.f32 0.0, %v1486
        %v1488 = vpop.f32.mrb[0].mxu0
        %v1489 = vpop.f32.mrb[0].mxu0
        %v1490 = vpop.f32.mrb[0].mxu0
        %1491 = vdwg.mxu0
        %v1492 = vpack.c.bf16 %v1487, %v1487
        %v1494 = vsel %vm996, %v1492, 0
        %v1497 = vsel %vm1083, %v994, 0
        %1499 = vmatprep.subr.bf16.mxu0 0
        %1500 = vmatpush1.bf16.msra.mxu0 %v1497
        %1501 = vmatprep.subr.bf16.mxu0 0
        %1502 = vmatpush1.bf16.msra.mxu0 0
        %1503 = vmatprep.subr.bf16.mxu0 0
        %1504 = vmatpush1.bf16.msra.mxu0 0
        %1505 = vmatprep.subr.bf16.mxu0 0
        %1506 = vmatpush1.bf16.msra.mxu0 0
        %1507 = vmatprep.subr.bf16.mxu0 0
        %1508 = vmatpush1.bf16.msra.mxu0 0
        %1509 = vmatprep.subr.bf16.mxu0 0
        %1510 = vmatpush1.bf16.msra.mxu0 0
        %1511 = vmatprep.subr.bf16.mxu0 0
        %1512 = vmatpush1.bf16.msra.mxu0 0
        %1513 = vmatprep.subr.bf16.mxu0 0
        %1514 = vmatpush1.bf16.msra.mxu0 0
        %1515 = vmatprep.subr.bf16.mxu0 0
        %1516 = vmatpush1.bf16.msra.mxu0 0
        %1517 = vmatprep.subr.bf16.mxu0 0
        %1518 = vmatpush1.bf16.msra.mxu0 0
        %1519 = vmatprep.subr.bf16.mxu0 0
        %1520 = vmatpush1.bf16.msra.mxu0 0
        %1521 = vmatprep.subr.bf16.mxu0 0
        %1522 = vmatpush1.bf16.msra.mxu0 0
        %1523 = vmatprep.subr.bf16.mxu0 0
        %1524 = vmatpush1.bf16.msra.mxu0 0
        %1525 = vmatprep.subr.bf16.mxu0 0
        %1526 = vmatpush1.bf16.msra.mxu0 0
        %1527 = vmatprep.subr.bf16.mxu0 0
        %1528 = vmatpush1.bf16.msra.mxu0 0
        %1529 = vmatprep.subr.bf16.mxu0 0
        %1530 = vmatpush1.bf16.msra.mxu0 0
        %1531 = vmatprep.mubr.bf16.mxu0 0
        %1532 = vmatmul.mubr.bf16.gmra.mrb[0].mxu0 %v1494
        %v1533 = vpop.f32.mrb[0].mxu0
        %v1534 = vadd.f32 0.0, %v1533
        %v1535 = vpop.f32.mrb[0].mxu0
        %v1536 = vpop.f32.mrb[0].mxu0
        %v1537 = vpop.f32.mrb[0].mxu0
        %1538 = vdwg.mxu0
        %v1539 = vadd.f32 %v1355, %v1534
        %1540 = vrot.lane.b32.xlu0 %v971, 104
        %v1541 = vpop.permute.xlu0 %1540
        %1542 = vrot.lane.b32.xlu0 %v1133, 104
        %v1543 = vpop.permute.xlu0 %1542
        %v1545 = vsel %vm996, %v1541, 0
        %v1548 = vsel %vm996, %v1543, 0
        %1550 = vmatprep.subr.bf16.mxu0 0
        %1551 = vmatpush1.bf16.xpose.msra.mxu0 %v1548
        %1552 = vmatprep.subr.bf16.mxu0 0
        %1553 = vmatpush1.bf16.xpose.msra.mxu0 0
        %1554 = vmatprep.subr.bf16.mxu0 0
        %1555 = vmatpush1.bf16.xpose.msra.mxu0 0
        %1556 = vmatprep.subr.bf16.mxu0 0
        %1557 = vmatpush1.bf16.xpose.msra.mxu0 0
        %1558 = vmatprep.subr.bf16.mxu0 0
        %1559 = vmatpush1.bf16.xpose.msra.mxu0 0
        %1560 = vmatprep.subr.bf16.mxu0 0
        %1561 = vmatpush1.bf16.xpose.msra.mxu0 0
        %1562 = vmatprep.subr.bf16.mxu0 0
        %1563 = vmatpush1.bf16.xpose.msra.mxu0 0
        %1564 = vmatprep.subr.bf16.mxu0 0
        %1565 = vmatpush1.bf16.xpose.msra.mxu0 0
        %1566 = vmatprep.subr.bf16.mxu0 0
        %1567 = vmatpush1.bf16.xpose.msra.mxu0 0
        %1568 = vmatprep.subr.bf16.mxu0 0
        %1569 = vmatpush1.bf16.xpose.msra.mxu0 0
        %1570 = vmatprep.subr.bf16.mxu0 0
        %1571 = vmatpush1.bf16.xpose.msra.mxu0 0
        %1572 = vmatprep.subr.bf16.mxu0 0
        %1573 = vmatpush1.bf16.xpose.msra.mxu0 0
        %1574 = vmatprep.subr.bf16.mxu0 0
        %1575 = vmatpush1.bf16.xpose.msra.mxu0 0
        %1576 = vmatprep.subr.bf16.mxu0 0
        %1577 = vmatpush1.bf16.xpose.msra.mxu0 0
        %1578 = vmatprep.subr.bf16.mxu0 0
        %1579 = vmatpush1.bf16.xpose.msra.mxu0 0
        %1580 = vmatprep.subr.bf16.mxu0 0
        %1581 = vmatpush1.bf16.xpose.msra.mxu0 0
        %1582 = vmatprep.mubr.bf16.mxu0 0
        %1583 = vmatmul.mubr.bf16.gmra.mrb[0].mxu0 %v1545
        %v1584 = vpop.f32.mrb[0].mxu0
        %v1585 = vadd.f32 0.0, %v1584
        %v1586 = vpop.f32.mrb[0].mxu0
        %v1587 = vpop.f32.mrb[0].mxu0
        %v1588 = vpop.f32.mrb[0].mxu0
        %1589 = vdwg.mxu0
        %v1590 = vrot.slane %v1044, 3
        %s1591 = vtos %v1590
        %v1592 = vstv %s1591
        %v1594 = vmul.f32 %v1592, %v989
        %v1595 = vmul.f32 %v1594, 1.442695
        %v1596 = vpow.pop %v1595
        %v1597 = vrot.slane %v1043, 3
        %s1598 = vtos %v1597
        %v1599 = vstv %s1598
        %v1601 = vmul.f32 %v1599, %v1596
        %v1602 = vrot.slane %v990, 3
        %s1603 = vtos %v1602
        %v1604 = vstv %s1603
        %v1606 = vadd.f32 %v1604, %v1601
        %v1607 = vmul.f32 %v1585, %v975
        %v1608 = vmul.f32 %v1607, %v1606
        %v1609 = vsel %vm984, %v1608, -1e+32
        %v1610 = vsel %vm996, %v1609, -inf
        %1611 = vmax.xlane.f32.xlu0 %v1610
        %v1612 = vpop.xlane.xlu0 %1611
        %v1613 = vsub.f32 %v1609, %v1612
        %v1614 = vmul.f32 %v1613, 1.442695
        %v1615 = vpow.pop %v1614
        %v1616 = vsel %vm996, %v1615, 0.0
        %1617 = vadd.xlane.f32.xlu0 %v1616
        %v1618 = vpop.xlane.xlu0 %1617
        %v1619 = vrcp.pop %v1618
        %v1620 = vmul.f32 1.0, %v1619
        %v1621 = vmul.f32 %v1615, %v1620
        %v1622 = vsel %vm1077, 0.0, %v1621
        %v1623 = vpack.c.bf16 %v1622, %v1622
        %1624 = vrot.lane.b32.xlu0 %v1218, 104
        %v1625 = vpop.permute.xlu0 %1624
        %v1627 = vsel %vm996, %v1623, 0
        %v1630 = vsel %vm1083, %v1625, 0
        %1632 = vmatprep.subr.bf16.mxu0 0
        %1633 = vmatpush1.bf16.msra.mxu0 %v1630
        %1634 = vmatprep.subr.bf16.mxu0 0
        %1635 = vmatpush1.bf16.msra.mxu0 0
        %1636 = vmatprep.subr.bf16.mxu0 0
        %1637 = vmatpush1.bf16.msra.mxu0 0
        %1638 = vmatprep.subr.bf16.mxu0 0
        %1639 = vmatpush1.bf16.msra.mxu0 0
        %1640 = vmatprep.subr.bf16.mxu0 0
        %1641 = vmatpush1.bf16.msra.mxu0 0
        %1642 = vmatprep.subr.bf16.mxu0 0
        %1643 = vmatpush1.bf16.msra.mxu0 0
        %1644 = vmatprep.subr.bf16.mxu0 0
        %1645 = vmatpush1.bf16.msra.mxu0 0
        %1646 = vmatprep.subr.bf16.mxu0 0
        %1647 = vmatpush1.bf16.msra.mxu0 0
        %1648 = vmatprep.subr.bf16.mxu0 0
        %1649 = vmatpush1.bf16.msra.mxu0 0
        %1650 = vmatprep.subr.bf16.mxu0 0
        %1651 = vmatpush1.bf16.msra.mxu0 0
        %1652 = vmatprep.subr.bf16.mxu0 0
        %1653 = vmatpush1.bf16.msra.mxu0 0
        %1654 = vmatprep.subr.bf16.mxu0 0
        %1655 = vmatpush1.bf16.msra.mxu0 0
        %1656 = vmatprep.subr.bf16.mxu0 0
        %1657 = vmatpush1.bf16.msra.mxu0 0
        %1658 = vmatprep.subr.bf16.mxu0 0
        %1659 = vmatpush1.bf16.msra.mxu0 0
        %1660 = vmatprep.subr.bf16.mxu0 0
        %1661 = vmatpush1.bf16.msra.mxu0 0
        %1662 = vmatprep.subr.bf16.mxu0 0
        %1663 = vmatpush1.bf16.msra.mxu0 0
        %1664 = vmatprep.mubr.bf16.mxu0 0
        %1665 = vmatmul.mubr.bf16.gmra.mrb[0].mxu0 %v1627
        %v1666 = vpop.f32.mrb[0].mxu0
        %v1667 = vadd.f32 0.0, %v1666
        %v1668 = vpop.f32.mrb[0].mxu0
        %v1669 = vpop.f32.mrb[0].mxu0
        %v1670 = vpop.f32.mrb[0].mxu0
        %1671 = vdwg.mxu0
        %v1672 = vpack.c.bf16 %v1667, %v1667
        %v1674 = vsel %vm996, %v1672, 0
        %v1677 = vsel %vm1083, %v995, 0
        %1679 = vmatprep.subr.bf16.mxu0 0
        %1680 = vmatpush1.bf16.msra.mxu0 %v1677
        %1681 = vmatprep.subr.bf16.mxu0 0
        %1682 = vmatpush1.bf16.msra.mxu0 0
        %1683 = vmatprep.subr.bf16.mxu0 0
        %1684 = vmatpush1.bf16.msra.mxu0 0
        %1685 = vmatprep.subr.bf16.mxu0 0
        %1686 = vmatpush1.bf16.msra.mxu0 0
        %1687 = vmatprep.subr.bf16.mxu0 0
        %1688 = vmatpush1.bf16.msra.mxu0 0
        %1689 = vmatprep.subr.bf16.mxu0 0
        %1690 = vmatpush1.bf16.msra.mxu0 0
        %1691 = vmatprep.subr.bf16.mxu0 0
        %1692 = vmatpush1.bf16.msra.mxu0 0
        %1693 = vmatprep.subr.bf16.mxu0 0
        %1694 = vmatpush1.bf16.msra.mxu0 0
        %1695 = vmatprep.subr.bf16.mxu0 0
        %1696 = vmatpush1.bf16.msra.mxu0 0
        %1697 = vmatprep.subr.bf16.mxu0 0
        %1698 = vmatpush1.bf16.msra.mxu0 0
        %1699 = vmatprep.subr.bf16.mxu0 0
        %1700 = vmatpush1.bf16.msra.mxu0 0
        %1701 = vmatprep.subr.bf16.mxu0 0
        %1702 = vmatpush1.bf16.msra.mxu0 0
        %1703 = vmatprep.subr.bf16.mxu0 0
        %1704 = vmatpush1.bf16.msra.mxu0 0
        %1705 = vmatprep.subr.bf16.mxu0 0
        %1706 = vmatpush1.bf16.msra.mxu0 0
        %1707 = vmatprep.subr.bf16.mxu0 0
        %1708 = vmatpush1.bf16.msra.mxu0 0
        %1709 = vmatprep.subr.bf16.mxu0 0
        %1710 = vmatpush1.bf16.msra.mxu0 0
        %1711 = vmatprep.mubr.bf16.mxu0 0
        %1712 = vmatmul.mubr.bf16.gmra.mrb[0].mxu0 %v1674
        %v1713 = vpop.f32.mrb[0].mxu0
        %v1714 = vadd.f32 0.0, %v1713
        %v1715 = vpop.f32.mrb[0].mxu0
        %v1716 = vpop.f32.mrb[0].mxu0
        %v1717 = vpop.f32.mrb[0].mxu0
        %1718 = vdwg.mxu0
        %v1719 = vadd.f32 %v1539, %v1714
        %v1720 = vld [vmem:[%s11] sm:$0x1]
        %v1722 = vlaneseq
        %v1723 = vshrl.u32 %v1722, 7
        %v1724 = vsub.s32 0, %v1723
        %v1725 = vrot.slane %v1720, %v1724
        %v1727 = vadd.f32 %v1719, %v1725
        %v1728 = vadd.f32 %v762, %v1727
        %v1729 = vld [vmem:[%s12] sm:$0x1]
        %v1730 = vld [vmem:[%s13] sm:$0x1]
        %v1731 = vsel %vm926, %v1728, 0.0
        %1732 = vadd.xlane.f32.xlu0 %v1731
        %v1733 = vpop.xlane.xlu0 %1732
        %v1734 = vrcp.pop 32.0
        %v1735 = vmul.f32 %v1733, %v1734
        %v1736 = vsub.f32 %v1728, %v1735
        %v1737 = vmul.f32 %v1736, %v1736
        %v1738 = vsel %vm926, %v1737, 0.0
        %1739 = vadd.xlane.f32.xlu0 %v1738
        %v1740 = vpop.xlane.xlu0 %1739
        %v1741 = vmul.f32 %v1740, %v1734
        %v1742 = vadd.f32 %v1741, 1e-05
        %v1743 = vrsqrt.pop %v1742
        %v1744 = vmul.f32 %v1736, %v1743
        %v1746 = vlaneseq
        %v1747 = vshrl.u32 %v1746, 7
        %v1748 = vsub.s32 0, %v1747
        %v1749 = vrot.slane %v1729, %v1748
        %v1751 = vmul.f32 %v1744, %v1749
        %v1753 = vlaneseq
        %v1754 = vshrl.u32 %v1753, 7
        %v1755 = vsub.s32 0, %v1754
        %v1756 = vrot.slane %v1730, %v1755
        %v1758 = vadd.f32 %v1751, %v1756
        %v1759 = vpack.c.bf16 %v1758, %v1758
        %v1760 = vld [vmem:[%s14] sm:$0xf]
        %v1761 = vld [vmem:[%s14 + $0x4] sm:$0xf]
        %v1762 = vld [vmem:[%s14 + $0x8] sm:$0xf]
        %v1763 = vld [vmem:[%s14 + $0xc] sm:$0xf]
        %v1764 = vld [vmem:[%s15] sm:$0x1]
        %v1766 = vlaneseq
        %v1767 = vshrl.u32 %v1766, 7
        %v1768 = vsub.s32 0, %v1767
        %v1769 = vrot.slane %v1764, %v1768
        %v1775 = vunpack.c.l.b16 %v1760
        %v1776 = vunpack.c.l.b16 %v1761
        %v1777 = vunpack.c.l.b16 %v1762
        %v1778 = vunpack.c.l.b16 %v1763
        %v1779 = vpack.c.b16 %v1776, %v1775
        %v1780 = vpack.c.b16 %v1778, %v1777
        %v1784 = vsel %vm926, %v1759, 0
        %1786 = vmatprep.subr.bf16.mxu0 0
        %1787 = vmatpush1.bf16.msra.mxu0 %v1779
        %1788 = vmatprep.subr.bf16.mxu0 0
        %1789 = vmatpush1.bf16.msra.mxu0 %v1780
        %1790 = vmatprep.subr.bf16.mxu0 0
        %1791 = vmatpush1.bf16.msra.mxu0 0
        %1792 = vmatprep.subr.bf16.mxu0 0
        %1793 = vmatpush1.bf16.msra.mxu0 0
        %1794 = vmatprep.subr.bf16.mxu0 0
        %1795 = vmatpush1.bf16.msra.mxu0 0
        %1796 = vmatprep.subr.bf16.mxu0 0
        %1797 = vmatpush1.bf16.msra.mxu0 0
        %1798 = vmatprep.subr.bf16.mxu0 0
        %1799 = vmatpush1.bf16.msra.mxu0 0
        %1800 = vmatprep.subr.bf16.mxu0 0
        %1801 = vmatpush1.bf16.msra.mxu0 0
        %1802 = vmatprep.subr.bf16.mxu0 0
        %1803 = vmatpush1.bf16.msra.mxu0 0
        %1804 = vmatprep.subr.bf16.mxu0 0
        %1805 = vmatpush1.bf16.msra.mxu0 0
        %1806 = vmatprep.subr.bf16.mxu0 0
        %1807 = vmatpush1.bf16.msra.mxu0 0
        %1808 = vmatprep.subr.bf16.mxu0 0
        %1809 = vmatpush1.bf16.msra.mxu0 0
        %1810 = vmatprep.subr.bf16.mxu0 0
        %1811 = vmatpush1.bf16.msra.mxu0 0
        %1812 = vmatprep.subr.bf16.mxu0 0
        %1813 = vmatpush1.bf16.msra.mxu0 0
        %1814 = vmatprep.subr.bf16.mxu0 0
        %1815 = vmatpush1.bf16.msra.mxu0 0
        %1816 = vmatprep.subr.bf16.mxu0 0
        %1817 = vmatpush1.bf16.msra.mxu0 0
        %1818 = vmatprep.mubr.bf16.mxu0 0
        %1819 = vmatmul.mubr.bf16.gmra.mrb[0].mxu0 %v1784
        %v1820 = vpop.f32.mrb[0].mxu0
        %v1821 = vadd.f32 %v1769, %v1820
        %v1822 = vpop.f32.mrb[0].mxu0
        %v1823 = vpop.f32.mrb[0].mxu0
        %v1824 = vpop.f32.mrb[0].mxu0
        %1825 = vdwg.mxu0
        %v1826 = vmax.f32 %v1821, 0.0
        %v1827 = vpack.c.bf16 %v1826, %v1826
        %v1828 = vld [vmem:[%s16] sm:$0xf]
        %v1829 = vld [vmem:[%s16 + $0x4] sm:$0xf]
        %v1830 = vld [vmem:[%s16 + $0x8] sm:$0xf]
        %v1831 = vld [vmem:[%s16 + $0xc] sm:$0xf]
        %v1832 = vld [vmem:[%s16 + $0x10] sm:$0xf]
        %v1833 = vld [vmem:[%s16 + $0x14] sm:$0xf]
        %v1834 = vld [vmem:[%s16 + $0x18] sm:$0xf]
        %v1835 = vld [vmem:[%s16 + $0x1c] sm:$0xf]
        %v1836 = vld [vmem:[%s17] sm:$0x1]
        %v1838 = vlaneseq
        %v1839 = vshrl.u32 %v1838, 7
        %v1840 = vsub.s32 0, %v1839
        %v1841 = vrot.slane %v1836, %v1840
        %v1851 = vunpack.c.l.b16 %v1828
        %v1852 = vunpack.c.l.b16 %v1829
        %v1853 = vunpack.c.l.b16 %v1830
        %v1854 = vunpack.c.l.b16 %v1831
        %v1855 = vunpack.c.l.b16 %v1832
        %v1856 = vunpack.c.l.b16 %v1833
        %v1857 = vunpack.c.l.b16 %v1834
        %v1858 = vunpack.c.l.b16 %v1835
        %v1859 = vpack.c.b16 %v1852, %v1851
        %v1860 = vpack.c.b16 %v1854, %v1853
        %v1861 = vpack.c.b16 %v1856, %v1855
        %v1862 = vpack.c.b16 %v1858, %v1857
        %vm1867 = vcmask 523264
        %v1869 = vsel %vm1867, %v1827, 0
        %1871 = vmatprep.subr.bf16.mxu0 0
        %1872 = vmatpush1.bf16.msra.mxu0 %v1859
        %1873 = vmatprep.subr.bf16.mxu0 0
        %1874 = vmatpush1.bf16.msra.mxu0 %v1860
        %1875 = vmatprep.subr.bf16.mxu0 0
        %1876 = vmatpush1.bf16.msra.mxu0 %v1861
        %1877 = vmatprep.subr.bf16.mxu0 0
        %1878 = vmatpush1.bf16.msra.mxu0 %v1862
        %1879 = vmatprep.subr.bf16.mxu0 0
        %1880 = vmatpush1.bf16.msra.mxu0 0
        %1881 = vmatprep.subr.bf16.mxu0 0
        %1882 = vmatpush1.bf16.msra.mxu0 0
        %1883 = vmatprep.subr.bf16.mxu0 0
        %1884 = vmatpush1.bf16.msra.mxu0 0
        %1885 = vmatprep.subr.bf16.mxu0 0
        %1886 = vmatpush1.bf16.msra.mxu0 0
        %1887 = vmatprep.subr.bf16.mxu0 0
        %1888 = vmatpush1.bf16.msra.mxu0 0
        %1889 = vmatprep.subr.bf16.mxu0 0
        %1890 = vmatpush1.bf16.msra.mxu0 0
        %1891 = vmatprep.subr.bf16.mxu0 0
        %1892 = vmatpush1.bf16.msra.mxu0 0
        %1893 = vmatprep.subr.bf16.mxu0 0
        %1894 = vmatpush1.bf16.msra.mxu0 0
        %1895 = vmatprep.subr.bf16.mxu0 0
        %1896 = vmatpush1.bf16.msra.mxu0 0
        %1897 = vmatprep.subr.bf16.mxu0 0
        %1898 = vmatpush1.bf16.msra.mxu0 0
        %1899 = vmatprep.subr.bf16.mxu0 0
        %1900 = vmatpush1.bf16.msra.mxu0 0
        %1901 = vmatprep.subr.bf16.mxu0 0
        %1902 = vmatpush1.bf16.msra.mxu0 0
        %1903 = vmatprep.mubr.bf16.mxu0 0
        %1904 = vmatmul.mubr.bf16.gmra.mrb[0].mxu0 %v1869
        %v1905 = vpop.f32.mrb[0].mxu0
        %v1906 = vadd.f32 %v1841, %v1905
        %v1907 = vpop.f32.mrb[0].mxu0
        %v1908 = vpop.f32.mrb[0].mxu0
        %v1909 = vpop.f32.mrb[0].mxu0
        %1910 = vdwg.mxu0
        %v1911 = vadd.f32 %v1758, %v1906
        %v1912 = vld [vmem:[%s18] sm:$0x1]
        %v1913 = vld [vmem:[%s19] sm:$0x1]
        %v1914 = vsel %vm926, %v1911, 0.0
        %1915 = vadd.xlane.f32.xlu0 %v1914
        %v1916 = vpop.xlane.xlu0 %1915
        %v1917 = vmul.f32 %v1916, %v1734
        %v1918 = vsub.f32 %v1911, %v1917
        %v1919 = vmul.f32 %v1918, %v1918
        %v1920 = vsel %vm926, %v1919, 0.0
        %1921 = vadd.xlane.f32.xlu0 %v1920
        %v1922 = vpop.xlane.xlu0 %1921
        %v1923 = vmul.f32 %v1922, %v1734
        %v1924 = vadd.f32 %v1923, 1e-05
        %v1925 = vrsqrt.pop %v1924
        %v1926 = vmul.f32 %v1918, %v1925
        %v1928 = vlaneseq
        %v1929 = vshrl.u32 %v1928, 7
        %v1930 = vsub.s32 0, %v1929
        %v1931 = vrot.slane %v1912, %v1930
        %v1933 = vmul.f32 %v1926, %v1931
        %v1935 = vlaneseq
        %v1936 = vshrl.u32 %v1935, 7
        %v1937 = vsub.s32 0, %v1936
        %v1938 = vrot.slane %v1913, %v1937
        %v1940 = vadd.f32 %v1933, %v1938
        %1941 = vst.msk [vmem:[%s753] sm:$0xff] %vm926, %v1940
        %s1942 = sand.u32 %s506, 1
        %s1943 = scalar_lea.sflag [#allocation6], %s1942
        %s1944 = sand.u32 %s506, 1
        %s1945 = smul.addr %s1944, 8
        %s1946 = scalar_lea.vmem [#allocation10], %s1945
        // Predicated region
        $region117: #{tpu_custom_call.1} parent=99 // pred_check
          %p1947 = pneg %p516
        $region118: #{tpu_custom_call.1} parent=99 // pred_check_branch
          %1949 = sbr.rel (%p1947) target = $region120
        $region119: #{tpu_custom_call.1} parent=99 // pred_region
          %s1951 = ssub.s32 128, 128
          %1952 = vsyncadd %s1943, %s1951
          %s1953 = sadd.s32 %s45, %s44
          %s1954 = smul.addr %s1953, 128
          %s1955 = scalar_lea.hbm %s20, %s1954
          %s1957 = sshll.u32 %s1946, 4
          %s1958 = int_to_ptr.vmem [resolvable:$true] %s1957
          %1960 = dma.vmem_to_hbm [thread:$0]  %s1958, 128, %s1955, %s1943
        $region120: #{tpu_custom_call.1} parent=99 // pred_fallthru
          _
      $region100: #{tpu_custom_call.1} parent=5 // pred_fallthru
        _
      %p1961 = scmp.le.s32.totalorder 2, %s35
      // Predicated region
      $region121: #{tpu_custom_call.1} parent=5 // pred_check
        %p1962 = pneg %p1961
      $region122: #{tpu_custom_call.1} parent=5 // pred_check_branch
        %1964 = sbr.rel (%p1962) target = $region124
      $region123: #{tpu_custom_call.1} parent=5 // pred_region
        %s1965 = ssub.s32 %s35, 2
        // Predicated region
        $region125: #{tpu_custom_call.1} parent=123 // pred_check
          %p1966 = pneg %p522
        $region126: #{tpu_custom_call.1} parent=123 // pred_check_branch
          %1968 = sbr.rel (%p1966) target = $region128
        $region127: #{tpu_custom_call.1} parent=123 // pred_region
          %s1969 = sand.u32 %s507, 1
          %s1970 = scalar_lea.sflag [#allocation6], %s1969
          %s1971 = sand.u32 %s507, 1
          %s1972 = smul.addr %s1971, 8
          %s1973 = scalar_lea.vmem [#allocation10], %s1972
          %1974 = dma.done %s1970, 128
        $region128: #{tpu_custom_call.1} parent=123 // pred_fallthru
          _
      $region124: #{tpu_custom_call.1} parent=5 // pred_fallthru
        _
    $region6: #{tpu_custom_call.1} parent=1 // loop_footer
      %s39 = sadd.s32 1, %s35
    $region7: #{tpu_custom_call.1} parent=1 // loop_footer_branch
      %34 = sbr.rel target = $region3
    $region8: #{tpu_custom_call.1} parent=1 // loop_exit
      _
    %1975 = vsyncpa [#allocation5], 1
    %s1976 = scalar_lea.sflag [#allocation5], 1
    %1977 = vsyncpa %s1976, 1
    %1978 = vsyncpa [#allocation8], 1
    %s1979 = scalar_lea.sflag [#allocation8], 1
    %1980 = vsyncpa %s1979, 1
    %1981 = vsyncpa [#allocation6], 1
    %s1982 = scalar_lea.sflag [#allocation6], 1
    %1983 = vsyncpa %s1982, 1

</llo_original>
